<compile_context>
chip_gen: v5e
topology: v5e:2x2
jax: 0.10.0
libtpu: 0.0.40
codegen_flags: <defaults>
</compile_context>

<pallas_src>
import functools

import jax
import jax.numpy as jnp
from jax.experimental import pallas as pl
from jax.experimental.pallas import tpu as pltpu

IN_FEATURES = 784          # 28 * 28 (kernel consumes the ragged K directly)
H1 = 512
H2 = 128
NUM_CLASSES = 10
C_PAD = 128                # lane-dense padded class dim
NEG_BIG = -1.0e30          # bias value for padded (fake) classes


def _round_up(n, m):
    return ((n + m - 1) // m) * m


# --------------------------------------------------------------------------- #
# Kernel
# --------------------------------------------------------------------------- #
def mlp_logsoftmax_kernel(x_ref, w1_ref, b1_ref, w2_ref, b2_ref, w3_ref, b3_ref, o_ref):
    # x arrives as f32 straight from HBM; cast to bf16 for the MXU (VPU work hidden
    # under the fc1 matmul), accumulate in f32 via preferred_element_type.
    x = x_ref[...].astype(jnp.bfloat16)
    # fc1 + ReLU
    h1 = jnp.dot(x, w1_ref[...], preferred_element_type=jnp.float32) + b1_ref[...]
    h1 = jnp.maximum(h1, 0.0).astype(jnp.bfloat16)
    # fc2 + ReLU
    h2 = jnp.dot(h1, w2_ref[...], preferred_element_type=jnp.float32) + b2_ref[...]
    h2 = jnp.maximum(h2, 0.0).astype(jnp.bfloat16)
    # fc3 (class dim padded to 128; padded columns get bias = -1e30 -> exp() == 0)
    logits = jnp.dot(h2, w3_ref[...], preferred_element_type=jnp.float32) + b3_ref[...]
    # numerically stable LogSoftmax over the class dim
    m = jnp.max(logits, axis=-1, keepdims=True)
    shifted = logits - m
    lse = jnp.log(jnp.sum(jnp.exp(shifted), axis=-1, keepdims=True))
    o_ref[...] = shifted - lse


# --------------------------------------------------------------------------- #
# One-time parameter preparation (hoisted out of the per-call path)
# --------------------------------------------------------------------------- #
def prepare_params(params):
    """Cast weights to bf16 and pad the class dim once, at param-load time."""
    w1, b1, w2, b2, w3, b3 = params
    w1_bf = jnp.asarray(w1, jnp.float32).astype(jnp.bfloat16)           # (784, 512)
    b1_f = jnp.asarray(b1, jnp.float32).reshape(1, H1)
    w2_bf = jnp.asarray(w2, jnp.float32).astype(jnp.bfloat16)           # (512, 128)
    b2_f = jnp.asarray(b2, jnp.float32).reshape(1, H2)
    # w3: pad columns 10 -> 128 with zeros; padded classes get a huge negative bias
    w3_pad = jnp.zeros((H2, C_PAD), jnp.float32).at[:, :NUM_CLASSES].set(
        jnp.asarray(w3, jnp.float32)).astype(jnp.bfloat16)
    b3_pad = jnp.full((1, C_PAD), NEG_BIG, jnp.float32).at[:, :NUM_CLASSES].set(
        jnp.asarray(b3, jnp.float32).reshape(1, NUM_CLASSES))
    return (w1_bf, b1_f, w2_bf, b2_f, w3_pad, b3_pad)


# --------------------------------------------------------------------------- #
# Tile policy (static per batch size)
# --------------------------------------------------------------------------- #
def _pick_batch_tile(B):
    B16 = _round_up(B, 16)
    if B16 >= 1024:
        return 512                         # big batch: amortize per-step overhead
    if B16 >= 128:
        # split into >= 2 tiles so the "parallel" batch axis can shard across
        # v7x's two TensorCores; keep tiles 128-aligned once they are >= 128
        half = B16 // 2
        return (half // 128) * 128 if half >= 128 else _round_up(half, 16)
    return max(16, B16)                    # tiny batch: single tile


# --------------------------------------------------------------------------- #
# Forward
# --------------------------------------------------------------------------- #
@functools.partial(jax.jit, static_argnames=("batch_tile",))
def neural_net_forward(x, prepared_params, *, batch_tile=None):
    """x: any shape with trailing elements = 784 per sample (e.g. (B,1,28,28)).
    prepared_params: output of prepare_params().
    Returns f32 log-probabilities of shape (B, 10)."""
    w1_p, b1_p, w2_p, b2_p, w3_p, b3_p = prepared_params

    x2d = x.reshape(-1, IN_FEATURES).astype(jnp.float32)   # x.view(-1, 784)
    B = x2d.shape[0]

    if batch_tile is None:
        batch_tile = _pick_batch_tile(B)
    batch_tile = max(16, _round_up(batch_tile, 16))

    # Pad the batch so the grid divides evenly; padded rows are zeros, sliced off.
    B_pad = _round_up(B, batch_tile)
    if B_pad != B:
        x2d = jnp.pad(x2d, ((0, B_pad - B), (0, 0)))

    grid = (B_pad // batch_tile,)

    flops = 2 * B_pad * (IN_FEATURES * H1 + H1 * H2 + H2 * C_PAD)
    bytes_accessed = (B_pad * IN_FEATURES * 4 + B_pad * C_PAD * 4
                      + (IN_FEATURES * H1 + H1 * H2 + H2 * C_PAD) * 2
                      + (H1 + H2 + C_PAD) * 4)
    cost = pl.CostEstimate(flops=flops,
                           transcendentals=B_pad * (C_PAD + 1),
                           bytes_accessed=bytes_accessed)

    out = pl.pallas_call(
        mlp_logsoftmax_kernel,
        out_shape=jax.ShapeDtypeStruct((B_pad, C_PAD), jnp.float32),
        grid=grid,
        in_specs=[
            pl.BlockSpec((batch_tile, IN_FEATURES), lambda i: (i, 0)),  # x tile (f32, ragged K)
            pl.BlockSpec((IN_FEATURES, H1), lambda i: (0, 0)),          # w1 (grid-invariant)
            pl.BlockSpec((1, H1), lambda i: (0, 0)),                    # b1
            pl.BlockSpec((H1, H2), lambda i: (0, 0)),                   # w2
            pl.BlockSpec((1, H2), lambda i: (0, 0)),                    # b2
            pl.BlockSpec((H2, C_PAD), lambda i: (0, 0)),                # w3 (padded cols)
            pl.BlockSpec((1, C_PAD), lambda i: (0, 0)),                 # b3 (padded = -1e30)
        ],
        out_specs=pl.BlockSpec((batch_tile, C_PAD), lambda i: (i, 0)),  # lane-dense output
        compiler_params=pltpu.CompilerParams(
            dimension_semantics=("parallel",),   # batch tiles shard across TCs on v7x
        ),
        cost_estimate=cost,
    )(x2d, w1_p, b1_p, w2_p, b2_p, w3_p, b3_p)
    return out[:B, :NUM_CLASSES]


# --------------------------------------------------------------------------- #
# Init & pure-JAX reference
# --------------------------------------------------------------------------- #
def init_params(key, input_size=IN_FEATURES, hidden_size1=H1, hidden_size2=H2,
                num_classes=NUM_CLASSES):
    """Deterministic init mimicking nn.Linear's U(-1/sqrt(fan_in), 1/sqrt(fan_in)).
    Weights stored as (in, out) for the kernel's x @ W convention."""
    ks = jax.random.split(key, 6)

    def linear(kw, kb, fan_in, fan_out):
        bound = 1.0 / jnp.sqrt(jnp.float32(fan_in))
        w = jax.random.uniform(kw, (fan_in, fan_out), jnp.float32, -bound, bound)
        b = jax.random.uniform(kb, (1, fan_out), jnp.float32, -bound, bound)
        return w, b

    w1, b1 = linear(ks[0], ks[1], input_size, hidden_size1)
    w2, b2 = linear(ks[2], ks[3], hidden_size1, hidden_size2)
    w3, b3 = linear(ks[4], ks[5], hidden_size2, num_classes)
    return (w1, b1, w2, b2, w3, b3)


def reference_forward(x, params):
    """Pure-JAX reference using the same bf16-operand / f32-accumulate precision."""
    w1, b1, w2, b2, w3, b3 = params
    x2d = x.reshape(-1, IN_FEATURES).astype(jnp.float32).astype(jnp.bfloat16)
    h1 = jnp.maximum(
        jnp.dot(x2d, w1.astype(jnp.bfloat16), preferred_element_type=jnp.float32) + b1, 0.0)
    h2 = jnp.maximum(
        jnp.dot(h1.astype(jnp.bfloat16), w2.astype(jnp.bfloat16),
                preferred_element_type=jnp.float32) + b2, 0.0)
    logits = jnp.dot(h2.astype(jnp.bfloat16), w3.astype(jnp.bfloat16),
                     preferred_element_type=jnp.float32) + b3
    return jax.nn.log_softmax(logits, axis=1)


if __name__ == "__main__":
    key = jax.random.PRNGKey(0)
    k_params, k_x = jax.random.split(key)
    params = init_params(k_params)
    prepared = prepare_params(params)          # one-time weight prep (hoisted)

    # Small MNIST-like batch: (B, 1, 28, 28)
    B = 32
    x = jax.random.normal(k_x, (B, 1, 28, 28), dtype=jnp.float32)

    ref = reference_forward(x, params)

    # 1) default tiling (single tile for this small batch)
    out = jax.block_until_ready(neural_net_forward(x, prepared))
    assert out.shape == (B, NUM_CLASSES), out.shape
    assert jnp.allclose(out, ref, atol=1e-3, rtol=1e-3), float(jnp.max(jnp.abs(out - ref)))

    # 2) explicit small tile -> multi-step grid (exercises the pipelined path)
    out2 = jax.block_until_ready(neural_net_forward(x, prepared, batch_tile=16))
    assert out2.shape == (B, NUM_CLASSES), out2.shape
    assert jnp.allclose(out2, ref, atol=1e-3, rtol=1e-3), float(jnp.max(jnp.abs(out2 - ref)))

    print("KERNEL_OK")
</pallas_src>

<mosaic_0001>
module attributes {stable_mosaic.version = 11 : i64} {
  func.func @mlp_logsoftmax_kernel(%arg0: i32, %arg1: memref<32x784xf32, #tpu.memory_space<vmem>>, %arg2: memref<784x512xbf16, #tpu.memory_space<vmem>>, %arg3: memref<1x512xf32, #tpu.memory_space<vmem>>, %arg4: memref<512x128xbf16, #tpu.memory_space<vmem>>, %arg5: memref<1x128xf32, #tpu.memory_space<vmem>>, %arg6: memref<128x128xbf16, #tpu.memory_space<vmem>>, %arg7: memref<1x128xf32, #tpu.memory_space<vmem>>, %arg8: memref<32x128xf32, #tpu.memory_space<vmem>>) attributes {dimension_semantics = [#tpu.dimension_semantics<parallel>], iteration_bounds = array<i64: 1>, scalar_prefetch = 0 : i64, scratch_operands = 0 : i64, tpu.core_type = #tpu.core_type<tc>, window_params = [{transform_indices = @transform_0, window_bounds = array<i64: 32, 784>}, {pipeline_mode = #tpu.pipeline_mode<synchronous>, transform_indices = @transform_1, window_bounds = array<i64: 784, 512>}, {pipeline_mode = #tpu.pipeline_mode<synchronous>, transform_indices = @transform_2, window_bounds = array<i64: 1, 512>}, {pipeline_mode = #tpu.pipeline_mode<synchronous>, transform_indices = @transform_3, window_bounds = array<i64: 512, 128>}, {pipeline_mode = #tpu.pipeline_mode<synchronous>, transform_indices = @transform_4, window_bounds = array<i64: 1, 128>}, {pipeline_mode = #tpu.pipeline_mode<synchronous>, transform_indices = @transform_5, window_bounds = array<i64: 128, 128>}, {pipeline_mode = #tpu.pipeline_mode<synchronous>, transform_indices = @transform_6, window_bounds = array<i64: 1, 128>}, {transform_indices = @transform_7, window_bounds = array<i64: 32, 128>}]} {
    %c0 = arith.constant 0 : index
    %c0_0 = arith.constant 0 : index
    %0 = vector.load %arg1[%c0, %c0_0] : memref<32x784xf32, #tpu.memory_space<vmem>>, vector<32x784xf32>
    %1 = arith.truncf %0 : vector<32x784xf32> to vector<32x784xbf16>
    %c0_1 = arith.constant 0 : index
    %c0_2 = arith.constant 0 : index
    %2 = vector.load %arg2[%c0_1, %c0_2] : memref<784x512xbf16, #tpu.memory_space<vmem>>, vector<784x512xbf16>
    %cst = arith.constant dense<0.000000e+00> : vector<32x512xf32>
    %3 = tpu.matmul %1, %2, %cst {dimension_numbers = #tpu.dot_dimension_numbers<[1], [0], [0], [1], [0, 0, 1, 1], [], []>} : vector<32x784xbf16>, vector<784x512xbf16>, vector<32x512xf32> -> vector<32x512xf32>
    %c0_3 = arith.constant 0 : index
    %c0_4 = arith.constant 0 : index
    %4 = vector.load %arg3[%c0_3, %c0_4] : memref<1x512xf32, #tpu.memory_space<vmem>>, vector<1x512xf32>
    %5 = vector.broadcast %4 : vector<1x512xf32> to vector<32x512xf32>
    %6 = arith.addf %3, %5 : vector<32x512xf32>
    %cst_5 = arith.constant 0.000000e+00 : f32
    %7 = vector.broadcast %cst_5 : f32 to vector<32x512xf32>
    %8 = arith.maximumf %6, %7 : vector<32x512xf32>
    %9 = arith.truncf %8 : vector<32x512xf32> to vector<32x512xbf16>
    %c0_6 = arith.constant 0 : index
    %c0_7 = arith.constant 0 : index
    %10 = vector.load %arg4[%c0_6, %c0_7] : memref<512x128xbf16, #tpu.memory_space<vmem>>, vector<512x128xbf16>
    %cst_8 = arith.constant dense<0.000000e+00> : vector<32x128xf32>
    %11 = tpu.matmul %9, %10, %cst_8 {dimension_numbers = #tpu.dot_dimension_numbers<[1], [0], [0], [1], [0, 0, 1, 1], [], []>} : vector<32x512xbf16>, vector<512x128xbf16>, vector<32x128xf32> -> vector<32x128xf32>
    %c0_9 = arith.constant 0 : index
    %c0_10 = arith.constant 0 : index
    %12 = vector.load %arg5[%c0_9, %c0_10] : memref<1x128xf32, #tpu.memory_space<vmem>>, vector<1x128xf32>
    %13 = vector.broadcast %12 : vector<1x128xf32> to vector<32x128xf32>
    %14 = arith.addf %11, %13 : vector<32x128xf32>
    %cst_11 = arith.constant 0.000000e+00 : f32
    %15 = vector.broadcast %cst_11 : f32 to vector<32x128xf32>
    %16 = arith.maximumf %14, %15 : vector<32x128xf32>
    %17 = arith.truncf %16 : vector<32x128xf32> to vector<32x128xbf16>
    %c0_12 = arith.constant 0 : index
    %c0_13 = arith.constant 0 : index
    %18 = vector.load %arg6[%c0_12, %c0_13] : memref<128x128xbf16, #tpu.memory_space<vmem>>, vector<128x128xbf16>
    %cst_14 = arith.constant dense<0.000000e+00> : vector<32x128xf32>
    %19 = tpu.matmul %17, %18, %cst_14 {dimension_numbers = #tpu.dot_dimension_numbers<[1], [0], [0], [1], [0, 0, 1, 1], [], []>} : vector<32x128xbf16>, vector<128x128xbf16>, vector<32x128xf32> -> vector<32x128xf32>
    %c0_15 = arith.constant 0 : index
    %c0_16 = arith.constant 0 : index
    %20 = vector.load %arg7[%c0_15, %c0_16] : memref<1x128xf32, #tpu.memory_space<vmem>>, vector<1x128xf32>
    %21 = vector.broadcast %20 : vector<1x128xf32> to vector<32x128xf32>
    %22 = arith.addf %19, %21 : vector<32x128xf32>
    %cst_17 = arith.constant dense<0xFF800000> : vector<32xf32>
    %23 = vector.multi_reduction <maximumf>, %22, %cst_17 [1] : vector<32x128xf32> to vector<32xf32>
    %24 = vector.shape_cast %23 : vector<32xf32> to vector<32x1xf32>
    %25 = vector.broadcast %24 : vector<32x1xf32> to vector<32x128xf32>
    %26 = arith.subf %22, %25 : vector<32x128xf32>
    %27 = math.exp %26 : vector<32x128xf32>
    %cst_18 = arith.constant dense<0.000000e+00> : vector<32xf32>
    %28 = vector.multi_reduction <add>, %27, %cst_18 [1] : vector<32x128xf32> to vector<32xf32>
    %29 = vector.shape_cast %28 : vector<32xf32> to vector<32x1xf32>
    %30 = math.log %29 : vector<32x1xf32>
    %31 = vector.broadcast %30 : vector<32x1xf32> to vector<32x128xf32>
    %32 = arith.subf %26, %31 : vector<32x128xf32>
    %c0_19 = arith.constant 0 : index
    %c0_20 = arith.constant 0 : index
    %33 = vector.load %arg8[%c0_19, %c0_20] : memref<32x128xf32, #tpu.memory_space<vmem>>, vector<32x128xf32>
    tpu.vector_store %arg8[%c0_19, %c0_20], %32 {strides = array<i32>} : memref<32x128xf32, #tpu.memory_space<vmem>>, vector<32x128xf32>,
    return
  }
  func.func @transform_0(%arg0: i32) -> (i32, i32) {
    %c0_i32 = arith.constant 0 : i32
    %c0_i32_0 = arith.constant 0 : i32
    return %arg0, %c0_i32 : i32, i32
  }
  func.func @transform_1(%arg0: i32) -> (i32, i32) {
    %c0_i32 = arith.constant 0 : i32
    %c0_i32_0 = arith.constant 0 : i32
    %c0_i32_1 = arith.constant 0 : i32
    return %c0_i32, %c0_i32_0 : i32, i32
  }
  func.func @transform_2(%arg0: i32) -> (i32, i32) {
    %c0_i32 = arith.constant 0 : i32
    %c0_i32_0 = arith.constant 0 : i32
    %c0_i32_1 = arith.constant 0 : i32
    return %c0_i32, %c0_i32_0 : i32, i32
  }
  func.func @transform_3(%arg0: i32) -> (i32, i32) {
    %c0_i32 = arith.constant 0 : i32
    %c0_i32_0 = arith.constant 0 : i32
    %c0_i32_1 = arith.constant 0 : i32
    return %c0_i32, %c0_i32_0 : i32, i32
  }
  func.func @transform_4(%arg0: i32) -> (i32, i32) {
    %c0_i32 = arith.constant 0 : i32
    %c0_i32_0 = arith.constant 0 : i32
    %c0_i32_1 = arith.constant 0 : i32
    return %c0_i32, %c0_i32_0 : i32, i32
  }
  func.func @transform_5(%arg0: i32) -> (i32, i32) {
    %c0_i32 = arith.constant 0 : i32
    %c0_i32_0 = arith.constant 0 : i32
    %c0_i32_1 = arith.constant 0 : i32
    return %c0_i32, %c0_i32_0 : i32, i32
  }
  func.func @transform_6(%arg0: i32) -> (i32, i32) {
    %c0_i32 = arith.constant 0 : i32
    %c0_i32_0 = arith.constant 0 : i32
    %c0_i32_1 = arith.constant 0 : i32
    return %c0_i32, %c0_i32_0 : i32, i32
  }
  func.func @transform_7(%arg0: i32) -> (i32, i32) {
    %c0_i32 = arith.constant 0 : i32
    %c0_i32_0 = arith.constant 0 : i32
    return %arg0, %c0_i32 : i32, i32
  }
}

</mosaic_0001>

<llo_original>
// kernel: neural_net_forward.1
$region0: #{neural_net_forward.1}
  #allocation0 [shape = 'u32[]', space=smem, size = 0x4, offset = 0x4, fixed_abs, tag = 'smem constant byte address 0x4 - core index']
  #allocation1 [shape = 'u32[72,128]{1,0:T(1,128)}', space=vmem, size = 0x9000, scoped, tag = 'internal scratch']
  %s0 = inlined_call_operand.vmem [shape: f32[32,784], index: 0, kind: input, shape index: {}]
  %s1 = inlined_call_operand.hbm [shape: bf16[784,512], index: 1, kind: input, shape index: {}]
  %s2 = inlined_call_operand.vmem [shape: f32[1,512], index: 2, kind: input, shape index: {}]
  %s3 = inlined_call_operand.vmem [shape: bf16[512,128], index: 3, kind: input, shape index: {}]
  %s4 = inlined_call_operand.vmem [shape: f32[1,128], index: 4, kind: input, shape index: {}]
  %s5 = inlined_call_operand.vmem [shape: bf16[128,128], index: 5, kind: input, shape index: {}]
  %s6 = inlined_call_operand.vmem [shape: f32[1,128], index: 6, kind: input, shape index: {}]
  %s7 = inlined_call_operand.vmem [shape: f32[32,128], index: 7, kind: output, shape index: {}]
  %s8 = sld [smem:[#allocation0]]
  $region42: #{neural_net_forward.1} parent=0
    _
  %s10 = ssub.s32 1, %s8
  %s11 = scalar_select 0, %s10, %s8
  $region1: #{neural_net_forward.1} parent=0
    #allocation2 [shape = 'u8[802816]{0}', space=vmem, size = 0xc4000, scoped, tag = 'input window, operand 1, single buffered']
    #allocation3 [shape = 's32[1]{0}', space=sflag, size = 0x4, scoped, tag = 'scoped memory for neural_net_forward.1']
    %12 = vsyncpa [#allocation3], 0
    // Predicated region
    $region2: #{neural_net_forward.1} parent=1 // pred_check
      _
    $region3: #{neural_net_forward.1} parent=1 // pred_check_branch
      %14 = sbr.rel (0) target = $region5
    $region4: #{neural_net_forward.1} parent=1 // pred_region
      _
    $region5: #{neural_net_forward.1} parent=1 // pred_fallthru
      _
    // Predicated region
    $region6: #{neural_net_forward.1} parent=1 // pred_check
      _
    $region7: #{neural_net_forward.1} parent=1 // pred_check_branch
      %16 = sbr.rel (0) target = $region9
    $region8: #{neural_net_forward.1} parent=1 // pred_region
      %18 = vsyncadd [#allocation3], 0
      %s19 = sshll.u32 %s1, 4
      %s20 = int_to_ptr.hbm [resolvable:$true] %s19
      %s21 = sshll.u32 [#allocation2], 4
      %s22 = int_to_ptr.vmem [resolvable:$true] %s21
      %27 = dma.hbm_to_vmem [thread:$0]  %s20, 25088, %s22, [#allocation3], 256, 256, 16
    $region9: #{neural_net_forward.1} parent=1 // pred_fallthru
      _
    // Predicated region
    $region10: #{neural_net_forward.1} parent=1 // pred_check
      _
    $region11: #{neural_net_forward.1} parent=1 // pred_check_branch
      %29 = sbr.rel (0) target = $region13
    $region12: #{neural_net_forward.1} parent=1 // pred_region
      _
    $region13: #{neural_net_forward.1} parent=1 // pred_fallthru
      _
    // Predicated region
    $region14: #{neural_net_forward.1} parent=1 // pred_check
      _
    $region15: #{neural_net_forward.1} parent=1 // pred_check_branch
      %31 = sbr.rel (0) target = $region17
    $region16: #{neural_net_forward.1} parent=1 // pred_region
      _
    $region17: #{neural_net_forward.1} parent=1 // pred_fallthru
      _
    // Predicated region
    $region18: #{neural_net_forward.1} parent=1 // pred_check
      _
    $region19: #{neural_net_forward.1} parent=1 // pred_check_branch
      %33 = sbr.rel (0) target = $region21
    $region20: #{neural_net_forward.1} parent=1 // pred_region
      _
    $region21: #{neural_net_forward.1} parent=1 // pred_fallthru
      _
    // Predicated region
    $region22: #{neural_net_forward.1} parent=1 // pred_check
      _
    $region23: #{neural_net_forward.1} parent=1 // pred_check_branch
      %35 = sbr.rel (0) target = $region25
    $region24: #{neural_net_forward.1} parent=1 // pred_region
      _
    $region25: #{neural_net_forward.1} parent=1 // pred_fallthru
      _
    // Predicated region
    $region26: #{neural_net_forward.1} parent=1 // pred_check
      _
    $region27: #{neural_net_forward.1} parent=1 // pred_check_branch
      %37 = sbr.rel (0) target = $region29
    $region28: #{neural_net_forward.1} parent=1 // pred_region
      _
    $region29: #{neural_net_forward.1} parent=1 // pred_fallthru
      _
    // Predicated region
    $region30: #{neural_net_forward.1} parent=1 // pred_check
      _
    $region31: #{neural_net_forward.1} parent=1 // pred_check_branch
      %39 = sbr.rel (0) target = $region33
    $region32: #{neural_net_forward.1} parent=1 // pred_region
      %41 = dma.done [#allocation3], 25088
    $region33: #{neural_net_forward.1} parent=1 // pred_fallthru
      _
    %v43 = vld [vmem:[%s0] sm:$0xff]
    %v44 = vld [vmem:[%s0 + $0x8] sm:$0xff]
    %v45 = vld [vmem:[%s0 + $0x10] sm:$0xff]
    %v46 = vld [vmem:[%s0 + $0x18] sm:$0xff]
    %v47 = vld [vmem:[%s0 + $0x20] sm:$0xff]
    %v48 = vld [vmem:[%s0 + $0x28] sm:$0xff]
    %v49 = vld [vmem:[%s0 + $0x30] sm:$0xff]
    %v50 = vld [vmem:[%s0 + $0x38] sm:$0xff]
    %v51 = vld [vmem:[%s0 + $0x40] sm:$0xff]
    %v52 = vld [vmem:[%s0 + $0x48] sm:$0xff]
    %v53 = vld [vmem:[%s0 + $0x50] sm:$0xff]
    %v54 = vld [vmem:[%s0 + $0x58] sm:$0xff]
    %v55 = vld [vmem:[%s0 + $0x60] sm:$0xff]
    %v56 = vld [vmem:[%s0 + $0x68] sm:$0xff]
    %v57 = vld [vmem:[%s0 + $0x70] sm:$0xff]
    %v58 = vld [vmem:[%s0 + $0x78] sm:$0xff]
    %v59 = vld [vmem:[%s0 + $0x80] sm:$0xff]
    %v60 = vld [vmem:[%s0 + $0x88] sm:$0xff]
    %v61 = vld [vmem:[%s0 + $0x90] sm:$0xff]
    %v62 = vld [vmem:[%s0 + $0x98] sm:$0xff]
    %v63 = vld [vmem:[%s0 + $0xa0] sm:$0xff]
    %v64 = vld [vmem:[%s0 + $0xa8] sm:$0xff]
    %v65 = vld [vmem:[%s0 + $0xb0] sm:$0xff]
    %v66 = vld [vmem:[%s0 + $0xb8] sm:$0xff]
    %v67 = vld [vmem:[%s0 + $0xc0] sm:$0xff]
    %v68 = vld [vmem:[%s0 + $0xc8] sm:$0xff]
    %v69 = vld [vmem:[%s0 + $0xd0] sm:$0xff]
    %v70 = vld [vmem:[%s0 + $0xd8] sm:$0xff]
    %v71 = vpack.c.bf16 %v50, %v43
    %v72 = vpack.c.bf16 %v51, %v44
    %v73 = vpack.c.bf16 %v52, %v45
    %v74 = vpack.c.bf16 %v53, %v46
    %v75 = vpack.c.bf16 %v54, %v47
    %v76 = vpack.c.bf16 %v55, %v48
    %v77 = vpack.c.bf16 %v56, %v49
    %v78 = vpack.c.bf16 %v64, %v57
    %v79 = vpack.c.bf16 %v65, %v58
    %v80 = vpack.c.bf16 %v66, %v59
    %v81 = vpack.c.bf16 %v67, %v60
    %v82 = vpack.c.bf16 %v68, %v61
    %v83 = vpack.c.bf16 %v69, %v62
    %v84 = vpack.c.bf16 %v70, %v63
    %v85 = vld [vmem:[#allocation2] sm:$0xff]
    %v86 = vld [vmem:[#allocation2 + $0x8] sm:$0xff]
    %v87 = vld [vmem:[#allocation2 + $0x10] sm:$0xff]
    %v88 = vld [vmem:[#allocation2 + $0x18] sm:$0xff]
    %v89 = vld [vmem:[#allocation2 + $0x20] sm:$0xff]
    %v90 = vld [vmem:[#allocation2 + $0x28] sm:$0xff]
    %v91 = vld [vmem:[#allocation2 + $0x30] sm:$0xff]
    %v92 = vld [vmem:[#allocation2 + $0x38] sm:$0xff]
    %v93 = vld [vmem:[#allocation2 + $0x40] sm:$0xff]
    %v94 = vld [vmem:[#allocation2 + $0x48] sm:$0xff]
    %v95 = vld [vmem:[#allocation2 + $0x50] sm:$0xff]
    %v96 = vld [vmem:[#allocation2 + $0x58] sm:$0xff]
    %v97 = vld [vmem:[#allocation2 + $0x60] sm:$0xff]
    %v98 = vld [vmem:[#allocation2 + $0x68] sm:$0xff]
    %v99 = vld [vmem:[#allocation2 + $0x70] sm:$0xff]
    %v100 = vld [vmem:[#allocation2 + $0x78] sm:$0xff]
    %v101 = vld [vmem:[#allocation2 + $0x80] sm:$0xff]
    %v102 = vld [vmem:[#allocation2 + $0x88] sm:$0xff]
    %v103 = vld [vmem:[#allocation2 + $0x90] sm:$0xff]
    %v104 = vld [vmem:[#allocation2 + $0x98] sm:$0xff]
    %v105 = vld [vmem:[#allocation2 + $0xa0] sm:$0xff]
    %v106 = vld [vmem:[#allocation2 + $0xa8] sm:$0xff]
    %v107 = vld [vmem:[#allocation2 + $0xb0] sm:$0xff]
    %v108 = vld [vmem:[#allocation2 + $0xb8] sm:$0xff]
    %v109 = vld [vmem:[#allocation2 + $0xc0] sm:$0xff]
    %v110 = vld [vmem:[#allocation2 + $0xc8] sm:$0xff]
    %v111 = vld [vmem:[#allocation2 + $0xd0] sm:$0xff]
    %v112 = vld [vmem:[#allocation2 + $0xd8] sm:$0xff]
    %v113 = vld [vmem:[#allocation2 + $0xe0] sm:$0xff]
    %v114 = vld [vmem:[#allocation2 + $0xe8] sm:$0xff]
    %v115 = vld [vmem:[#allocation2 + $0xf0] sm:$0xff]
    %v116 = vld [vmem:[#allocation2 + $0xf8] sm:$0xff]
    %v117 = vld [vmem:[#allocation2 + $0x100] sm:$0xff]
    %v118 = vld [vmem:[#allocation2 + $0x108] sm:$0xff]
    %v119 = vld [vmem:[#allocation2 + $0x110] sm:$0xff]
    %v120 = vld [vmem:[#allocation2 + $0x118] sm:$0xff]
    %v121 = vld [vmem:[#allocation2 + $0x120] sm:$0xff]
    %v122 = vld [vmem:[#allocation2 + $0x128] sm:$0xff]
    %v123 = vld [vmem:[#allocation2 + $0x130] sm:$0xff]
    %v124 = vld [vmem:[#allocation2 + $0x138] sm:$0xff]
    %v125 = vld [vmem:[#allocation2 + $0x140] sm:$0xff]
    %v126 = vld [vmem:[#allocation2 + $0x148] sm:$0xff]
    %v127 = vld [vmem:[#allocation2 + $0x150] sm:$0xff]
    %v128 = vld [vmem:[#allocation2 + $0x158] sm:$0xff]
    %v129 = vld [vmem:[#allocation2 + $0x160] sm:$0xff]
    %v130 = vld [vmem:[#allocation2 + $0x168] sm:$0xff]
    %v131 = vld [vmem:[#allocation2 + $0x170] sm:$0xff]
    %v132 = vld [vmem:[#allocation2 + $0x178] sm:$0xff]
    %v133 = vld [vmem:[#allocation2 + $0x180] sm:$0xff]
    %v134 = vld [vmem:[#allocation2 + $0x188] sm:$0xff]
    %v135 = vld [vmem:[#allocation2 + $0x190] sm:$0xff]
    %v136 = vld [vmem:[#allocation2 + $0x198] sm:$0xff]
    %v137 = vld [vmem:[#allocation2 + $0x1a0] sm:$0xff]
    %v138 = vld [vmem:[#allocation2 + $0x1a8] sm:$0xff]
    %v139 = vld [vmem:[#allocation2 + $0x1b0] sm:$0xff]
    %v140 = vld [vmem:[#allocation2 + $0x1b8] sm:$0xff]
    %v141 = vld [vmem:[#allocation2 + $0x1c0] sm:$0xff]
    %v142 = vld [vmem:[#allocation2 + $0x1c8] sm:$0xff]
    %v143 = vld [vmem:[#allocation2 + $0x1d0] sm:$0xff]
    %v144 = vld [vmem:[#allocation2 + $0x1d8] sm:$0xff]
    %v145 = vld [vmem:[#allocation2 + $0x1e0] sm:$0xff]
    %v146 = vld [vmem:[#allocation2 + $0x1e8] sm:$0xff]
    %v147 = vld [vmem:[#allocation2 + $0x1f0] sm:$0xff]
    %v148 = vld [vmem:[#allocation2 + $0x1f8] sm:$0xff]
    %v149 = vld [vmem:[#allocation2 + $0x200] sm:$0xff]
    %v150 = vld [vmem:[#allocation2 + $0x208] sm:$0xff]
    %v151 = vld [vmem:[#allocation2 + $0x210] sm:$0xff]
    %v152 = vld [vmem:[#allocation2 + $0x218] sm:$0xff]
    %v153 = vld [vmem:[#allocation2 + $0x220] sm:$0xff]
    %v154 = vld [vmem:[#allocation2 + $0x228] sm:$0xff]
    %v155 = vld [vmem:[#allocation2 + $0x230] sm:$0xff]
    %v156 = vld [vmem:[#allocation2 + $0x238] sm:$0xff]
    %v157 = vld [vmem:[#allocation2 + $0x240] sm:$0xff]
    %v158 = vld [vmem:[#allocation2 + $0x248] sm:$0xff]
    %v159 = vld [vmem:[#allocation2 + $0x250] sm:$0xff]
    %v160 = vld [vmem:[#allocation2 + $0x258] sm:$0xff]
    %v161 = vld [vmem:[#allocation2 + $0x260] sm:$0xff]
    %v162 = vld [vmem:[#allocation2 + $0x268] sm:$0xff]
    %v163 = vld [vmem:[#allocation2 + $0x270] sm:$0xff]
    %v164 = vld [vmem:[#allocation2 + $0x278] sm:$0xff]
    %v165 = vld [vmem:[#allocation2 + $0x280] sm:$0xff]
    %v166 = vld [vmem:[#allocation2 + $0x288] sm:$0xff]
    %v167 = vld [vmem:[#allocation2 + $0x290] sm:$0xff]
    %v168 = vld [vmem:[#allocation2 + $0x298] sm:$0xff]
    %v169 = vld [vmem:[#allocation2 + $0x2a0] sm:$0xff]
    %v170 = vld [vmem:[#allocation2 + $0x2a8] sm:$0xff]
    %v171 = vld [vmem:[#allocation2 + $0x2b0] sm:$0xff]
    %v172 = vld [vmem:[#allocation2 + $0x2b8] sm:$0xff]
    %v173 = vld [vmem:[#allocation2 + $0x2c0] sm:$0xff]
    %v174 = vld [vmem:[#allocation2 + $0x2c8] sm:$0xff]
    %v175 = vld [vmem:[#allocation2 + $0x2d0] sm:$0xff]
    %v176 = vld [vmem:[#allocation2 + $0x2d8] sm:$0xff]
    %v177 = vld [vmem:[#allocation2 + $0x2e0] sm:$0xff]
    %v178 = vld [vmem:[#allocation2 + $0x2e8] sm:$0xff]
    %v179 = vld [vmem:[#allocation2 + $0x2f0] sm:$0xff]
    %v180 = vld [vmem:[#allocation2 + $0x2f8] sm:$0xff]
    %v181 = vld [vmem:[#allocation2 + $0x300] sm:$0xff]
    %v182 = vld [vmem:[#allocation2 + $0x308] sm:$0xff]
    %v183 = vld [vmem:[#allocation2 + $0x310] sm:$0xff]
    %v184 = vld [vmem:[#allocation2 + $0x318] sm:$0xff]
    %v185 = vld [vmem:[#allocation2 + $0x320] sm:$0xff]
    %v186 = vld [vmem:[#allocation2 + $0x328] sm:$0xff]
    %v187 = vld [vmem:[#allocation2 + $0x330] sm:$0xff]
    %v188 = vld [vmem:[#allocation2 + $0x338] sm:$0xff]
    %v189 = vld [vmem:[#allocation2 + $0x340] sm:$0xff]
    %v190 = vld [vmem:[#allocation2 + $0x348] sm:$0xff]
    %v191 = vld [vmem:[#allocation2 + $0x350] sm:$0xff]
    %v192 = vld [vmem:[#allocation2 + $0x358] sm:$0xff]
    %v193 = vld [vmem:[#allocation2 + $0x360] sm:$0xff]
    %v194 = vld [vmem:[#allocation2 + $0x368] sm:$0xff]
    %v195 = vld [vmem:[#allocation2 + $0x370] sm:$0xff]
    %v196 = vld [vmem:[#allocation2 + $0x378] sm:$0xff]
    %v197 = vld [vmem:[#allocation2 + $0x380] sm:$0xff]
    %v198 = vld [vmem:[#allocation2 + $0x388] sm:$0xff]
    %v199 = vld [vmem:[#allocation2 + $0x390] sm:$0xff]
    %v200 = vld [vmem:[#allocation2 + $0x398] sm:$0xff]
    %v201 = vld [vmem:[#allocation2 + $0x3a0] sm:$0xff]
    %v202 = vld [vmem:[#allocation2 + $0x3a8] sm:$0xff]
    %v203 = vld [vmem:[#allocation2 + $0x3b0] sm:$0xff]
    %v204 = vld [vmem:[#allocation2 + $0x3b8] sm:$0xff]
    %v205 = vld [vmem:[#allocation2 + $0x3c0] sm:$0xff]
    %v206 = vld [vmem:[#allocation2 + $0x3c8] sm:$0xff]
    %v207 = vld [vmem:[#allocation2 + $0x3d0] sm:$0xff]
    %v208 = vld [vmem:[#allocation2 + $0x3d8] sm:$0xff]
    %v209 = vld [vmem:[#allocation2 + $0x3e0] sm:$0xff]
    %v210 = vld [vmem:[#allocation2 + $0x3e8] sm:$0xff]
    %v211 = vld [vmem:[#allocation2 + $0x3f0] sm:$0xff]
    %v212 = vld [vmem:[#allocation2 + $0x3f8] sm:$0xff]
    %v213 = vld [vmem:[#allocation2 + $0x400] sm:$0xff]
    %v214 = vld [vmem:[#allocation2 + $0x408] sm:$0xff]
    %v215 = vld [vmem:[#allocation2 + $0x410] sm:$0xff]
    %v216 = vld [vmem:[#allocation2 + $0x418] sm:$0xff]
    %v217 = vld [vmem:[#allocation2 + $0x420] sm:$0xff]
    %v218 = vld [vmem:[#allocation2 + $0x428] sm:$0xff]
    %v219 = vld [vmem:[#allocation2 + $0x430] sm:$0xff]
    %v220 = vld [vmem:[#allocation2 + $0x438] sm:$0xff]
    %v221 = vld [vmem:[#allocation2 + $0x440] sm:$0xff]
    %v222 = vld [vmem:[#allocation2 + $0x448] sm:$0xff]
    %v223 = vld [vmem:[#allocation2 + $0x450] sm:$0xff]
    %v224 = vld [vmem:[#allocation2 + $0x458] sm:$0xff]
    %v225 = vld [vmem:[#allocation2 + $0x460] sm:$0xff]
    %v226 = vld [vmem:[#allocation2 + $0x468] sm:$0xff]
    %v227 = vld [vmem:[#allocation2 + $0x470] sm:$0xff]
    %v228 = vld [vmem:[#allocation2 + $0x478] sm:$0xff]
    %v229 = vld [vmem:[#allocation2 + $0x480] sm:$0xff]
    %v230 = vld [vmem:[#allocation2 + $0x488] sm:$0xff]
    %v231 = vld [vmem:[#allocation2 + $0x490] sm:$0xff]
    %v232 = vld [vmem:[#allocation2 + $0x498] sm:$0xff]
    %v233 = vld [vmem:[#allocation2 + $0x4a0] sm:$0xff]
    %v234 = vld [vmem:[#allocation2 + $0x4a8] sm:$0xff]
    %v235 = vld [vmem:[#allocation2 + $0x4b0] sm:$0xff]
    %v236 = vld [vmem:[#allocation2 + $0x4b8] sm:$0xff]
    %v237 = vld [vmem:[#allocation2 + $0x4c0] sm:$0xff]
    %v238 = vld [vmem:[#allocation2 + $0x4c8] sm:$0xff]
    %v239 = vld [vmem:[#allocation2 + $0x4d0] sm:$0xff]
    %v240 = vld [vmem:[#allocation2 + $0x4d8] sm:$0xff]
    %v241 = vld [vmem:[#allocation2 + $0x4e0] sm:$0xff]
    %v242 = vld [vmem:[#allocation2 + $0x4e8] sm:$0xff]
    %v243 = vld [vmem:[#allocation2 + $0x4f0] sm:$0xff]
    %v244 = vld [vmem:[#allocation2 + $0x4f8] sm:$0xff]
    %v245 = vld [vmem:[#allocation2 + $0x500] sm:$0xff]
    %v246 = vld [vmem:[#allocation2 + $0x508] sm:$0xff]
    %v247 = vld [vmem:[#allocation2 + $0x510] sm:$0xff]
    %v248 = vld [vmem:[#allocation2 + $0x518] sm:$0xff]
    %v249 = vld [vmem:[#allocation2 + $0x520] sm:$0xff]
    %v250 = vld [vmem:[#allocation2 + $0x528] sm:$0xff]
    %v251 = vld [vmem:[#allocation2 + $0x530] sm:$0xff]
    %v252 = vld [vmem:[#allocation2 + $0x538] sm:$0xff]
    %v253 = vld [vmem:[#allocation2 + $0x540] sm:$0xff]
    %v254 = vld [vmem:[#allocation2 + $0x548] sm:$0xff]
    %v255 = vld [vmem:[#allocation2 + $0x550] sm:$0xff]
    %v256 = vld [vmem:[#allocation2 + $0x558] sm:$0xff]
    %v257 = vld [vmem:[#allocation2 + $0x560] sm:$0xff]
    %v258 = vld [vmem:[#allocation2 + $0x568] sm:$0xff]
    %v259 = vld [vmem:[#allocation2 + $0x570] sm:$0xff]
    %v260 = vld [vmem:[#allocation2 + $0x578] sm:$0xff]
    %v261 = vld [vmem:[#allocation2 + $0x580] sm:$0xff]
    %v262 = vld [vmem:[#allocation2 + $0x588] sm:$0xff]
    %v263 = vld [vmem:[#allocation2 + $0x590] sm:$0xff]
    %v264 = vld [vmem:[#allocation2 + $0x598] sm:$0xff]
    %v265 = vld [vmem:[#allocation2 + $0x5a0] sm:$0xff]
    %v266 = vld [vmem:[#allocation2 + $0x5a8] sm:$0xff]
    %v267 = vld [vmem:[#allocation2 + $0x5b0] sm:$0xff]
    %v268 = vld [vmem:[#allocation2 + $0x5b8] sm:$0xff]
    %v269 = vld [vmem:[#allocation2 + $0x5c0] sm:$0xff]
    %v270 = vld [vmem:[#allocation2 + $0x5c8] sm:$0xff]
    %v271 = vld [vmem:[#allocation2 + $0x5d0] sm:$0xff]
    %v272 = vld [vmem:[#allocation2 + $0x5d8] sm:$0xff]
    %v273 = vld [vmem:[#allocation2 + $0x5e0] sm:$0xff]
    %v274 = vld [vmem:[#allocation2 + $0x5e8] sm:$0xff]
    %v275 = vld [vmem:[#allocation2 + $0x5f0] sm:$0xff]
    %v276 = vld [vmem:[#allocation2 + $0x5f8] sm:$0xff]
    %v277 = vld [vmem:[#allocation2 + $0x600] sm:$0xff]
    %v278 = vld [vmem:[#allocation2 + $0x608] sm:$0xff]
    %v279 = vld [vmem:[#allocation2 + $0x610] sm:$0xff]
    %v280 = vld [vmem:[#allocation2 + $0x618] sm:$0xff]
    %v281 = vld [vmem:[%s2] sm:$0xf]
    %v283 = vperm.slane %v281, 0
    %v284 = vperm.slane %v281, 1
    %v285 = vperm.slane %v281, 2
    %v286 = vperm.slane %v281, 3
    %v487 = vunpack.c.l.b16 %v85
    %v488 = vunpack.c.h.b16 %v85
    %v489 = vunpack.c.l.b16 %v86
    %v490 = vunpack.c.h.b16 %v86
    %v491 = vunpack.c.l.b16 %v87
    %v492 = vunpack.c.h.b16 %v87
    %v493 = vunpack.c.l.b16 %v88
    %v494 = vunpack.c.h.b16 %v88
    %v495 = vunpack.c.l.b16 %v89
    %v496 = vunpack.c.h.b16 %v89
    %v497 = vunpack.c.l.b16 %v90
    %v498 = vunpack.c.h.b16 %v90
    %v499 = vunpack.c.l.b16 %v91
    %v500 = vunpack.c.h.b16 %v91
    %v501 = vunpack.c.l.b16 %v92
    %v502 = vunpack.c.h.b16 %v92
    %v503 = vunpack.c.l.b16 %v93
    %v504 = vunpack.c.h.b16 %v93
    %v505 = vunpack.c.l.b16 %v94
    %v506 = vunpack.c.h.b16 %v94
    %v507 = vunpack.c.l.b16 %v95
    %v508 = vunpack.c.h.b16 %v95
    %v509 = vunpack.c.l.b16 %v96
    %v510 = vunpack.c.h.b16 %v96
    %v511 = vunpack.c.l.b16 %v97
    %v512 = vunpack.c.h.b16 %v97
    %v513 = vunpack.c.l.b16 %v98
    %v514 = vunpack.c.h.b16 %v98
    %v515 = vunpack.c.l.b16 %v99
    %v516 = vunpack.c.h.b16 %v99
    %v517 = vunpack.c.l.b16 %v100
    %v518 = vunpack.c.h.b16 %v100
    %v519 = vunpack.c.l.b16 %v101
    %v520 = vunpack.c.h.b16 %v101
    %v521 = vunpack.c.l.b16 %v102
    %v522 = vunpack.c.h.b16 %v102
    %v523 = vunpack.c.l.b16 %v103
    %v524 = vunpack.c.h.b16 %v103
    %v525 = vunpack.c.l.b16 %v104
    %v526 = vunpack.c.h.b16 %v104
    %v527 = vunpack.c.l.b16 %v105
    %v528 = vunpack.c.h.b16 %v105
    %v529 = vunpack.c.l.b16 %v106
    %v530 = vunpack.c.h.b16 %v106
    %v531 = vunpack.c.l.b16 %v107
    %v532 = vunpack.c.h.b16 %v107
    %v533 = vunpack.c.l.b16 %v108
    %v534 = vunpack.c.h.b16 %v108
    %v535 = vunpack.c.l.b16 %v109
    %v536 = vunpack.c.h.b16 %v109
    %v537 = vunpack.c.l.b16 %v110
    %v538 = vunpack.c.h.b16 %v110
    %v539 = vunpack.c.l.b16 %v111
    %v540 = vunpack.c.h.b16 %v111
    %v541 = vunpack.c.l.b16 %v112
    %v542 = vunpack.c.h.b16 %v112
    %v543 = vunpack.c.l.b16 %v113
    %v544 = vunpack.c.h.b16 %v113
    %v545 = vunpack.c.l.b16 %v114
    %v546 = vunpack.c.h.b16 %v114
    %v547 = vunpack.c.l.b16 %v115
    %v548 = vunpack.c.h.b16 %v115
    %v549 = vunpack.c.l.b16 %v116
    %v550 = vunpack.c.h.b16 %v116
    %v551 = vunpack.c.l.b16 %v117
    %v552 = vunpack.c.h.b16 %v117
    %v553 = vunpack.c.l.b16 %v118
    %v554 = vunpack.c.h.b16 %v118
    %v555 = vunpack.c.l.b16 %v119
    %v556 = vunpack.c.h.b16 %v119
    %v557 = vunpack.c.l.b16 %v120
    %v558 = vunpack.c.h.b16 %v120
    %v559 = vunpack.c.l.b16 %v121
    %v560 = vunpack.c.h.b16 %v121
    %v561 = vunpack.c.l.b16 %v122
    %v562 = vunpack.c.h.b16 %v122
    %v563 = vunpack.c.l.b16 %v123
    %v564 = vunpack.c.h.b16 %v123
    %v565 = vunpack.c.l.b16 %v124
    %v566 = vunpack.c.h.b16 %v124
    %v567 = vunpack.c.l.b16 %v125
    %v568 = vunpack.c.h.b16 %v125
    %v569 = vunpack.c.l.b16 %v126
    %v570 = vunpack.c.h.b16 %v126
    %v571 = vunpack.c.l.b16 %v127
    %v572 = vunpack.c.h.b16 %v127
    %v573 = vunpack.c.l.b16 %v128
    %v574 = vunpack.c.h.b16 %v128
    %v575 = vunpack.c.l.b16 %v129
    %v576 = vunpack.c.h.b16 %v129
    %v577 = vunpack.c.l.b16 %v130
    %v578 = vunpack.c.h.b16 %v130
    %v579 = vunpack.c.l.b16 %v131
    %v580 = vunpack.c.h.b16 %v131
    %v581 = vunpack.c.l.b16 %v132
    %v582 = vunpack.c.h.b16 %v132
    %v583 = vunpack.c.l.b16 %v133
    %v584 = vunpack.c.h.b16 %v133
    %v585 = vunpack.c.l.b16 %v134
    %v586 = vunpack.c.h.b16 %v134
    %v587 = vunpack.c.l.b16 %v135
    %v588 = vunpack.c.h.b16 %v135
    %v589 = vunpack.c.l.b16 %v136
    %v590 = vunpack.c.h.b16 %v136
    %v591 = vunpack.c.l.b16 %v137
    %v592 = vunpack.c.h.b16 %v137
    %v593 = vunpack.c.l.b16 %v138
    %v594 = vunpack.c.h.b16 %v138
    %v595 = vunpack.c.l.b16 %v139
    %v596 = vunpack.c.h.b16 %v139
    %v597 = vunpack.c.l.b16 %v140
    %v598 = vunpack.c.h.b16 %v140
    %v599 = vunpack.c.l.b16 %v141
    %v600 = vunpack.c.h.b16 %v141
    %v601 = vunpack.c.l.b16 %v142
    %v602 = vunpack.c.h.b16 %v142
    %v603 = vunpack.c.l.b16 %v143
    %v604 = vunpack.c.h.b16 %v143
    %v605 = vunpack.c.l.b16 %v144
    %v606 = vunpack.c.h.b16 %v144
    %v607 = vunpack.c.l.b16 %v145
    %v608 = vunpack.c.h.b16 %v145
    %v609 = vunpack.c.l.b16 %v146
    %v610 = vunpack.c.h.b16 %v146
    %v611 = vunpack.c.l.b16 %v147
    %v612 = vunpack.c.h.b16 %v147
    %v613 = vunpack.c.l.b16 %v148
    %v614 = vunpack.c.h.b16 %v148
    %v615 = vunpack.c.l.b16 %v149
    %v616 = vunpack.c.h.b16 %v149
    %v617 = vunpack.c.l.b16 %v150
    %v618 = vunpack.c.h.b16 %v150
    %v619 = vunpack.c.l.b16 %v151
    %v620 = vunpack.c.h.b16 %v151
    %v621 = vunpack.c.l.b16 %v152
    %v622 = vunpack.c.h.b16 %v152
    %v623 = vunpack.c.l.b16 %v153
    %v624 = vunpack.c.h.b16 %v153
    %v625 = vunpack.c.l.b16 %v154
    %v626 = vunpack.c.h.b16 %v154
    %v627 = vunpack.c.l.b16 %v155
    %v628 = vunpack.c.h.b16 %v155
    %v629 = vunpack.c.l.b16 %v156
    %v630 = vunpack.c.h.b16 %v156
    %v631 = vunpack.c.l.b16 %v157
    %v632 = vunpack.c.h.b16 %v157
    %v633 = vunpack.c.l.b16 %v158
    %v634 = vunpack.c.h.b16 %v158
    %v635 = vunpack.c.l.b16 %v159
    %v636 = vunpack.c.h.b16 %v159
    %v637 = vunpack.c.l.b16 %v160
    %v638 = vunpack.c.h.b16 %v160
    %v639 = vunpack.c.l.b16 %v161
    %v640 = vunpack.c.h.b16 %v161
    %v641 = vunpack.c.l.b16 %v162
    %v642 = vunpack.c.h.b16 %v162
    %v643 = vunpack.c.l.b16 %v163
    %v644 = vunpack.c.h.b16 %v163
    %v645 = vunpack.c.l.b16 %v164
    %v646 = vunpack.c.h.b16 %v164
    %v647 = vunpack.c.l.b16 %v165
    %v648 = vunpack.c.h.b16 %v165
    %v649 = vunpack.c.l.b16 %v166
    %v650 = vunpack.c.h.b16 %v166
    %v651 = vunpack.c.l.b16 %v167
    %v652 = vunpack.c.h.b16 %v167
    %v653 = vunpack.c.l.b16 %v168
    %v654 = vunpack.c.h.b16 %v168
    %v655 = vunpack.c.l.b16 %v169
    %v656 = vunpack.c.h.b16 %v169
    %v657 = vunpack.c.l.b16 %v170
    %v658 = vunpack.c.h.b16 %v170
    %v659 = vunpack.c.l.b16 %v171
    %v660 = vunpack.c.h.b16 %v171
    %v661 = vunpack.c.l.b16 %v172
    %v662 = vunpack.c.h.b16 %v172
    %v663 = vunpack.c.l.b16 %v173
    %v664 = vunpack.c.h.b16 %v173
    %v665 = vunpack.c.l.b16 %v174
    %v666 = vunpack.c.h.b16 %v174
    %v667 = vunpack.c.l.b16 %v175
    %v668 = vunpack.c.h.b16 %v175
    %v669 = vunpack.c.l.b16 %v176
    %v670 = vunpack.c.h.b16 %v176
    %v671 = vunpack.c.l.b16 %v177
    %v672 = vunpack.c.h.b16 %v177
    %v673 = vunpack.c.l.b16 %v178
    %v674 = vunpack.c.h.b16 %v178
    %v675 = vunpack.c.l.b16 %v179
    %v676 = vunpack.c.h.b16 %v179
    %v677 = vunpack.c.l.b16 %v180
    %v678 = vunpack.c.h.b16 %v180
    %v679 = vunpack.c.l.b16 %v181
    %v680 = vunpack.c.h.b16 %v181
    %v681 = vunpack.c.l.b16 %v182
    %v682 = vunpack.c.h.b16 %v182
    %v683 = vunpack.c.l.b16 %v183
    %v684 = vunpack.c.h.b16 %v183
    %v685 = vunpack.c.l.b16 %v184
    %v686 = vunpack.c.h.b16 %v184
    %v687 = vunpack.c.l.b16 %v185
    %v688 = vunpack.c.h.b16 %v185
    %v689 = vunpack.c.l.b16 %v186
    %v690 = vunpack.c.h.b16 %v186
    %v691 = vunpack.c.l.b16 %v187
    %v692 = vunpack.c.h.b16 %v187
    %v693 = vunpack.c.l.b16 %v188
    %v694 = vunpack.c.h.b16 %v188
    %v695 = vunpack.c.l.b16 %v189
    %v696 = vunpack.c.h.b16 %v189
    %v697 = vunpack.c.l.b16 %v190
    %v698 = vunpack.c.h.b16 %v190
    %v699 = vunpack.c.l.b16 %v191
    %v700 = vunpack.c.h.b16 %v191
    %v701 = vunpack.c.l.b16 %v192
    %v702 = vunpack.c.h.b16 %v192
    %v703 = vunpack.c.l.b16 %v193
    %v704 = vunpack.c.h.b16 %v193
    %v705 = vunpack.c.l.b16 %v194
    %v706 = vunpack.c.h.b16 %v194
    %v707 = vunpack.c.l.b16 %v195
    %v708 = vunpack.c.h.b16 %v195
    %v709 = vunpack.c.l.b16 %v196
    %v710 = vunpack.c.h.b16 %v196
    %v711 = vunpack.c.l.b16 %v197
    %v712 = vunpack.c.h.b16 %v197
    %v713 = vunpack.c.l.b16 %v198
    %v714 = vunpack.c.h.b16 %v198
    %v715 = vunpack.c.l.b16 %v199
    %v716 = vunpack.c.h.b16 %v199
    %v717 = vunpack.c.l.b16 %v200
    %v718 = vunpack.c.h.b16 %v200
    %v719 = vunpack.c.l.b16 %v201
    %v720 = vunpack.c.h.b16 %v201
    %v721 = vunpack.c.l.b16 %v202
    %v722 = vunpack.c.h.b16 %v202
    %v723 = vunpack.c.l.b16 %v203
    %v724 = vunpack.c.h.b16 %v203
    %v725 = vunpack.c.l.b16 %v204
    %v726 = vunpack.c.h.b16 %v204
    %v727 = vunpack.c.l.b16 %v205
    %v728 = vunpack.c.h.b16 %v205
    %v729 = vunpack.c.l.b16 %v206
    %v730 = vunpack.c.h.b16 %v206
    %v731 = vunpack.c.l.b16 %v207
    %v732 = vunpack.c.h.b16 %v207
    %v733 = vunpack.c.l.b16 %v208
    %v734 = vunpack.c.h.b16 %v208
    %v735 = vunpack.c.l.b16 %v209
    %v736 = vunpack.c.h.b16 %v209
    %v737 = vunpack.c.l.b16 %v210
    %v738 = vunpack.c.h.b16 %v210
    %v739 = vunpack.c.l.b16 %v211
    %v740 = vunpack.c.h.b16 %v211
    %v741 = vunpack.c.l.b16 %v212
    %v742 = vunpack.c.h.b16 %v212
    %v743 = vunpack.c.l.b16 %v213
    %v744 = vunpack.c.h.b16 %v213
    %v745 = vunpack.c.l.b16 %v214
    %v746 = vunpack.c.h.b16 %v214
    %v747 = vunpack.c.l.b16 %v215
    %v748 = vunpack.c.h.b16 %v215
    %v749 = vunpack.c.l.b16 %v216
    %v750 = vunpack.c.h.b16 %v216
    %v751 = vunpack.c.l.b16 %v217
    %v752 = vunpack.c.h.b16 %v217
    %v753 = vunpack.c.l.b16 %v218
    %v754 = vunpack.c.h.b16 %v218
    %v755 = vunpack.c.l.b16 %v219
    %v756 = vunpack.c.h.b16 %v219
    %v757 = vunpack.c.l.b16 %v220
    %v758 = vunpack.c.h.b16 %v220
    %v759 = vunpack.c.l.b16 %v221
    %v760 = vunpack.c.h.b16 %v221
    %v761 = vunpack.c.l.b16 %v222
    %v762 = vunpack.c.h.b16 %v222
    %v763 = vunpack.c.l.b16 %v223
    %v764 = vunpack.c.h.b16 %v223
    %v765 = vunpack.c.l.b16 %v224
    %v766 = vunpack.c.h.b16 %v224
    %v767 = vunpack.c.l.b16 %v225
    %v768 = vunpack.c.h.b16 %v225
    %v769 = vunpack.c.l.b16 %v226
    %v770 = vunpack.c.h.b16 %v226
    %v771 = vunpack.c.l.b16 %v227
    %v772 = vunpack.c.h.b16 %v227
    %v773 = vunpack.c.l.b16 %v228
    %v774 = vunpack.c.h.b16 %v228
    %v775 = vunpack.c.l.b16 %v229
    %v776 = vunpack.c.h.b16 %v229
    %v777 = vunpack.c.l.b16 %v230
    %v778 = vunpack.c.h.b16 %v230
    %v779 = vunpack.c.l.b16 %v231
    %v780 = vunpack.c.h.b16 %v231
    %v781 = vunpack.c.l.b16 %v232
    %v782 = vunpack.c.h.b16 %v232
    %v783 = vunpack.c.l.b16 %v233
    %v784 = vunpack.c.h.b16 %v233
    %v785 = vunpack.c.l.b16 %v234
    %v786 = vunpack.c.h.b16 %v234
    %v787 = vunpack.c.l.b16 %v235
    %v788 = vunpack.c.h.b16 %v235
    %v789 = vunpack.c.l.b16 %v236
    %v790 = vunpack.c.h.b16 %v236
    %v791 = vunpack.c.l.b16 %v237
    %v792 = vunpack.c.h.b16 %v237
    %v793 = vunpack.c.l.b16 %v238
    %v794 = vunpack.c.h.b16 %v238
    %v795 = vunpack.c.l.b16 %v239
    %v796 = vunpack.c.h.b16 %v239
    %v797 = vunpack.c.l.b16 %v240
    %v798 = vunpack.c.h.b16 %v240
    %v799 = vunpack.c.l.b16 %v241
    %v800 = vunpack.c.h.b16 %v241
    %v801 = vunpack.c.l.b16 %v242
    %v802 = vunpack.c.h.b16 %v242
    %v803 = vunpack.c.l.b16 %v243
    %v804 = vunpack.c.h.b16 %v243
    %v805 = vunpack.c.l.b16 %v244
    %v806 = vunpack.c.h.b16 %v244
    %v807 = vunpack.c.l.b16 %v245
    %v808 = vunpack.c.h.b16 %v245
    %v809 = vunpack.c.l.b16 %v246
    %v810 = vunpack.c.h.b16 %v246
    %v811 = vunpack.c.l.b16 %v247
    %v812 = vunpack.c.h.b16 %v247
    %v813 = vunpack.c.l.b16 %v248
    %v814 = vunpack.c.h.b16 %v248
    %v815 = vunpack.c.l.b16 %v249
    %v816 = vunpack.c.h.b16 %v249
    %v817 = vunpack.c.l.b16 %v250
    %v818 = vunpack.c.h.b16 %v250
    %v819 = vunpack.c.l.b16 %v251
    %v820 = vunpack.c.h.b16 %v251
    %v821 = vunpack.c.l.b16 %v252
    %v822 = vunpack.c.h.b16 %v252
    %v823 = vunpack.c.l.b16 %v253
    %v824 = vunpack.c.h.b16 %v253
    %v825 = vunpack.c.l.b16 %v254
    %v826 = vunpack.c.h.b16 %v254
    %v827 = vunpack.c.l.b16 %v255
    %v828 = vunpack.c.h.b16 %v255
    %v829 = vunpack.c.l.b16 %v256
    %v830 = vunpack.c.h.b16 %v256
    %v831 = vunpack.c.l.b16 %v257
    %v832 = vunpack.c.h.b16 %v257
    %v833 = vunpack.c.l.b16 %v258
    %v834 = vunpack.c.h.b16 %v258
    %v835 = vunpack.c.l.b16 %v259
    %v836 = vunpack.c.h.b16 %v259
    %v837 = vunpack.c.l.b16 %v260
    %v838 = vunpack.c.h.b16 %v260
    %v839 = vunpack.c.l.b16 %v261
    %v840 = vunpack.c.h.b16 %v261
    %v841 = vunpack.c.l.b16 %v262
    %v842 = vunpack.c.h.b16 %v262
    %v843 = vunpack.c.l.b16 %v263
    %v844 = vunpack.c.h.b16 %v263
    %v845 = vunpack.c.l.b16 %v264
    %v846 = vunpack.c.h.b16 %v264
    %v847 = vunpack.c.l.b16 %v265
    %v848 = vunpack.c.h.b16 %v265
    %v849 = vunpack.c.l.b16 %v266
    %v850 = vunpack.c.h.b16 %v266
    %v851 = vunpack.c.l.b16 %v267
    %v852 = vunpack.c.h.b16 %v267
    %v853 = vunpack.c.l.b16 %v268
    %v854 = vunpack.c.h.b16 %v268
    %v855 = vunpack.c.l.b16 %v269
    %v856 = vunpack.c.h.b16 %v269
    %v857 = vunpack.c.l.b16 %v270
    %v858 = vunpack.c.h.b16 %v270
    %v859 = vunpack.c.l.b16 %v271
    %v860 = vunpack.c.h.b16 %v271
    %v861 = vunpack.c.l.b16 %v272
    %v862 = vunpack.c.h.b16 %v272
    %v863 = vunpack.c.l.b16 %v273
    %v864 = vunpack.c.h.b16 %v273
    %v865 = vunpack.c.l.b16 %v274
    %v866 = vunpack.c.h.b16 %v274
    %v867 = vunpack.c.l.b16 %v275
    %v868 = vunpack.c.h.b16 %v275
    %v869 = vunpack.c.l.b16 %v276
    %v870 = vunpack.c.h.b16 %v276
    %v871 = vunpack.c.l.b16 %v277
    %v872 = vunpack.c.h.b16 %v277
    %v873 = vunpack.c.l.b16 %v278
    %v874 = vunpack.c.h.b16 %v278
    %v875 = vunpack.c.l.b16 %v279
    %v876 = vunpack.c.h.b16 %v279
    %v877 = vunpack.c.l.b16 %v280
    %v878 = vunpack.c.h.b16 %v280
    %v879 = vpack.c.b16 %v491, %v487
    %v880 = vpack.c.b16 %v492, %v488
    %v881 = vpack.c.b16 %v493, %v489
    %v882 = vpack.c.b16 %v494, %v490
    %v883 = vpack.c.b16 %v499, %v495
    %v884 = vpack.c.b16 %v500, %v496
    %v885 = vpack.c.b16 %v501, %v497
    %v886 = vpack.c.b16 %v502, %v498
    %v887 = vpack.c.b16 %v507, %v503
    %v888 = vpack.c.b16 %v508, %v504
    %v889 = vpack.c.b16 %v509, %v505
    %v890 = vpack.c.b16 %v510, %v506
    %v891 = vpack.c.b16 %v515, %v511
    %v892 = vpack.c.b16 %v516, %v512
    %v893 = vpack.c.b16 %v517, %v513
    %v894 = vpack.c.b16 %v518, %v514
    %v895 = vpack.c.b16 %v523, %v519
    %v896 = vpack.c.b16 %v524, %v520
    %v897 = vpack.c.b16 %v525, %v521
    %v898 = vpack.c.b16 %v526, %v522
    %v899 = vpack.c.b16 %v531, %v527
    %v900 = vpack.c.b16 %v532, %v528
    %v901 = vpack.c.b16 %v533, %v529
    %v902 = vpack.c.b16 %v534, %v530
    %v903 = vpack.c.b16 %v539, %v535
    %v904 = vpack.c.b16 %v540, %v536
    %v905 = vpack.c.b16 %v541, %v537
    %v906 = vpack.c.b16 %v542, %v538
    %v907 = vpack.c.b16 %v547, %v543
    %v908 = vpack.c.b16 %v548, %v544
    %v909 = vpack.c.b16 %v549, %v545
    %v910 = vpack.c.b16 %v550, %v546
    %v911 = vpack.c.b16 %v555, %v551
    %v912 = vpack.c.b16 %v556, %v552
    %v913 = vpack.c.b16 %v557, %v553
    %v914 = vpack.c.b16 %v558, %v554
    %v915 = vpack.c.b16 %v563, %v559
    %v916 = vpack.c.b16 %v564, %v560
    %v917 = vpack.c.b16 %v565, %v561
    %v918 = vpack.c.b16 %v566, %v562
    %v919 = vpack.c.b16 %v571, %v567
    %v920 = vpack.c.b16 %v572, %v568
    %v921 = vpack.c.b16 %v573, %v569
    %v922 = vpack.c.b16 %v574, %v570
    %v923 = vpack.c.b16 %v579, %v575
    %v924 = vpack.c.b16 %v580, %v576
    %v925 = vpack.c.b16 %v581, %v577
    %v926 = vpack.c.b16 %v582, %v578
    %v927 = vpack.c.b16 %v587, %v583
    %v928 = vpack.c.b16 %v588, %v584
    %v929 = vpack.c.b16 %v589, %v585
    %v930 = vpack.c.b16 %v590, %v586
    %v931 = vpack.c.b16 %v595, %v591
    %v932 = vpack.c.b16 %v596, %v592
    %v933 = vpack.c.b16 %v597, %v593
    %v934 = vpack.c.b16 %v598, %v594
    %v935 = vpack.c.b16 %v603, %v599
    %v936 = vpack.c.b16 %v604, %v600
    %v937 = vpack.c.b16 %v605, %v601
    %v938 = vpack.c.b16 %v606, %v602
    %v939 = vpack.c.b16 %v611, %v607
    %v940 = vpack.c.b16 %v612, %v608
    %v941 = vpack.c.b16 %v613, %v609
    %v942 = vpack.c.b16 %v614, %v610
    %v943 = vpack.c.b16 %v619, %v615
    %v944 = vpack.c.b16 %v620, %v616
    %v945 = vpack.c.b16 %v621, %v617
    %v946 = vpack.c.b16 %v622, %v618
    %v947 = vpack.c.b16 %v627, %v623
    %v948 = vpack.c.b16 %v628, %v624
    %v949 = vpack.c.b16 %v629, %v625
    %v950 = vpack.c.b16 %v630, %v626
    %v951 = vpack.c.b16 %v635, %v631
    %v952 = vpack.c.b16 %v636, %v632
    %v953 = vpack.c.b16 %v637, %v633
    %v954 = vpack.c.b16 %v638, %v634
    %v955 = vpack.c.b16 %v643, %v639
    %v956 = vpack.c.b16 %v644, %v640
    %v957 = vpack.c.b16 %v645, %v641
    %v958 = vpack.c.b16 %v646, %v642
    %v959 = vpack.c.b16 %v651, %v647
    %v960 = vpack.c.b16 %v652, %v648
    %v961 = vpack.c.b16 %v653, %v649
    %v962 = vpack.c.b16 %v654, %v650
    %v963 = vpack.c.b16 %v659, %v655
    %v964 = vpack.c.b16 %v660, %v656
    %v965 = vpack.c.b16 %v661, %v657
    %v966 = vpack.c.b16 %v662, %v658
    %v967 = vpack.c.b16 %v667, %v663
    %v968 = vpack.c.b16 %v668, %v664
    %v969 = vpack.c.b16 %v669, %v665
    %v970 = vpack.c.b16 %v670, %v666
    %v971 = vpack.c.b16 %v675, %v671
    %v972 = vpack.c.b16 %v676, %v672
    %v973 = vpack.c.b16 %v677, %v673
    %v974 = vpack.c.b16 %v678, %v674
    %v975 = vpack.c.b16 %v683, %v679
    %v976 = vpack.c.b16 %v684, %v680
    %v977 = vpack.c.b16 %v685, %v681
    %v978 = vpack.c.b16 %v686, %v682
    %v979 = vpack.c.b16 %v691, %v687
    %v980 = vpack.c.b16 %v692, %v688
    %v981 = vpack.c.b16 %v693, %v689
    %v982 = vpack.c.b16 %v694, %v690
    %v983 = vpack.c.b16 %v699, %v695
    %v984 = vpack.c.b16 %v700, %v696
    %v985 = vpack.c.b16 %v701, %v697
    %v986 = vpack.c.b16 %v702, %v698
    %v987 = vpack.c.b16 %v707, %v703
    %v988 = vpack.c.b16 %v708, %v704
    %v989 = vpack.c.b16 %v709, %v705
    %v990 = vpack.c.b16 %v710, %v706
    %v991 = vpack.c.b16 %v715, %v711
    %v992 = vpack.c.b16 %v716, %v712
    %v993 = vpack.c.b16 %v717, %v713
    %v994 = vpack.c.b16 %v718, %v714
    %v995 = vpack.c.b16 %v723, %v719
    %v996 = vpack.c.b16 %v724, %v720
    %v997 = vpack.c.b16 %v725, %v721
    %v998 = vpack.c.b16 %v726, %v722
    %v999 = vpack.c.b16 %v731, %v727
    %v1000 = vpack.c.b16 %v732, %v728
    %v1001 = vpack.c.b16 %v733, %v729
    %v1002 = vpack.c.b16 %v734, %v730
    %v1003 = vpack.c.b16 %v739, %v735
    %v1004 = vpack.c.b16 %v740, %v736
    %v1005 = vpack.c.b16 %v741, %v737
    %v1006 = vpack.c.b16 %v742, %v738
    %v1007 = vpack.c.b16 %v747, %v743
    %v1008 = vpack.c.b16 %v748, %v744
    %v1009 = vpack.c.b16 %v749, %v745
    %v1010 = vpack.c.b16 %v750, %v746
    %v1011 = vpack.c.b16 %v755, %v751
    %v1012 = vpack.c.b16 %v756, %v752
    %v1013 = vpack.c.b16 %v757, %v753
    %v1014 = vpack.c.b16 %v758, %v754
    %v1015 = vpack.c.b16 %v763, %v759
    %v1016 = vpack.c.b16 %v764, %v760
    %v1017 = vpack.c.b16 %v765, %v761
    %v1018 = vpack.c.b16 %v766, %v762
    %v1019 = vpack.c.b16 %v771, %v767
    %v1020 = vpack.c.b16 %v772, %v768
    %v1021 = vpack.c.b16 %v773, %v769
    %v1022 = vpack.c.b16 %v774, %v770
    %v1023 = vpack.c.b16 %v779, %v775
    %v1024 = vpack.c.b16 %v780, %v776
    %v1025 = vpack.c.b16 %v781, %v777
    %v1026 = vpack.c.b16 %v782, %v778
    %v1027 = vpack.c.b16 %v787, %v783
    %v1028 = vpack.c.b16 %v788, %v784
    %v1029 = vpack.c.b16 %v789, %v785
    %v1030 = vpack.c.b16 %v790, %v786
    %v1031 = vpack.c.b16 %v795, %v791
    %v1032 = vpack.c.b16 %v796, %v792
    %v1033 = vpack.c.b16 %v797, %v793
    %v1034 = vpack.c.b16 %v798, %v794
    %v1035 = vpack.c.b16 %v803, %v799
    %v1036 = vpack.c.b16 %v804, %v800
    %v1037 = vpack.c.b16 %v805, %v801
    %v1038 = vpack.c.b16 %v806, %v802
    %v1039 = vpack.c.b16 %v811, %v807
    %v1040 = vpack.c.b16 %v812, %v808
    %v1041 = vpack.c.b16 %v813, %v809
    %v1042 = vpack.c.b16 %v814, %v810
    %v1043 = vpack.c.b16 %v819, %v815
    %v1044 = vpack.c.b16 %v820, %v816
    %v1045 = vpack.c.b16 %v821, %v817
    %v1046 = vpack.c.b16 %v822, %v818
    %v1047 = vpack.c.b16 %v827, %v823
    %v1048 = vpack.c.b16 %v828, %v824
    %v1049 = vpack.c.b16 %v829, %v825
    %v1050 = vpack.c.b16 %v830, %v826
    %v1051 = vpack.c.b16 %v835, %v831
    %v1052 = vpack.c.b16 %v836, %v832
    %v1053 = vpack.c.b16 %v837, %v833
    %v1054 = vpack.c.b16 %v838, %v834
    %v1055 = vpack.c.b16 %v843, %v839
    %v1056 = vpack.c.b16 %v844, %v840
    %v1057 = vpack.c.b16 %v845, %v841
    %v1058 = vpack.c.b16 %v846, %v842
    %v1059 = vpack.c.b16 %v851, %v847
    %v1060 = vpack.c.b16 %v852, %v848
    %v1061 = vpack.c.b16 %v853, %v849
    %v1062 = vpack.c.b16 %v854, %v850
    %v1063 = vpack.c.b16 %v859, %v855
    %v1064 = vpack.c.b16 %v860, %v856
    %v1065 = vpack.c.b16 %v861, %v857
    %v1066 = vpack.c.b16 %v862, %v858
    %v1067 = vpack.c.b16 %v867, %v863
    %v1068 = vpack.c.b16 %v868, %v864
    %v1069 = vpack.c.b16 %v869, %v865
    %v1070 = vpack.c.b16 %v870, %v866
    %v1071 = vpack.c.b16 %v875, %v871
    %v1072 = vpack.c.b16 %v876, %v872
    %v1073 = vpack.c.b16 %v877, %v873
    %v1074 = vpack.c.b16 %v878, %v874
    %vm1271 = vcmask 130048
    %v1273 = vsel %vm1271, %v77, 0
    %v1276 = vsel %vm1271, %v84, 0
    %1278 = vmatpush.bf16.msra.mxu0 %v907
    %1279 = vmatpush.bf16.msra.mxu0 %v903
    %1280 = vmatpush.bf16.msra.mxu0 %v899
    %1281 = vmatpush.bf16.msra.mxu0 %v895
    %1282 = vmatpush.bf16.msra.mxu0 %v891
    %1283 = vmatpush.bf16.msra.mxu0 %v887
    %1284 = vmatpush.bf16.msra.mxu0 %v883
    %1285 = vmatpush.bf16.msra.mxu0 %v879
    %1286 = vmatmul.bf16.gmra.mxu0 %v71
    %v1287 = vpop.f32.mrf.mxu0
    %v1288 = vadd.f32 %v283, %v1287
    %v1289 = vpop.f32.mrf.mxu0
    %v1290 = vadd.f32 %v283, %v1289
    %1291 = vmatmul.bf16.gmra.mxu0 %v78
    %v1292 = vpop.f32.mrf.mxu0
    %v1293 = vadd.f32 %v283, %v1292
    %v1294 = vpop.f32.mrf.mxu0
    %v1295 = vadd.f32 %v283, %v1294
    %1296 = vdwg.mxu0
    %1297 = vmatpush.bf16.msra.mxu0 %v939
    %1298 = vmatpush.bf16.msra.mxu0 %v935
    %1299 = vmatpush.bf16.msra.mxu0 %v931
    %1300 = vmatpush.bf16.msra.mxu0 %v927
    %1301 = vmatpush.bf16.msra.mxu0 %v923
    %1302 = vmatpush.bf16.msra.mxu0 %v919
    %1303 = vmatpush.bf16.msra.mxu0 %v915
    %1304 = vmatpush.bf16.msra.mxu0 %v911
    %1305 = vmatmul.bf16.gmra.mxu0 %v72
    %v1306 = vpop.f32.mrf.mxu0
    %v1307 = vadd.f32 %v1288, %v1306
    %v1308 = vpop.f32.mrf.mxu0
    %v1309 = vadd.f32 %v1290, %v1308
    %1310 = vmatmul.bf16.gmra.mxu0 %v79
    %v1311 = vpop.f32.mrf.mxu0
    %v1312 = vadd.f32 %v1293, %v1311
    %v1313 = vpop.f32.mrf.mxu0
    %v1314 = vadd.f32 %v1295, %v1313
    %1315 = vdwg.mxu0
    %1316 = vmatpush.bf16.msra.mxu0 %v971
    %1317 = vmatpush.bf16.msra.mxu0 %v967
    %1318 = vmatpush.bf16.msra.mxu0 %v963
    %1319 = vmatpush.bf16.msra.mxu0 %v959
    %1320 = vmatpush.bf16.msra.mxu0 %v955
    %1321 = vmatpush.bf16.msra.mxu0 %v951
    %1322 = vmatpush.bf16.msra.mxu0 %v947
    %1323 = vmatpush.bf16.msra.mxu0 %v943
    %1324 = vmatmul.bf16.gmra.mxu0 %v73
    %v1325 = vpop.f32.mrf.mxu0
    %v1326 = vadd.f32 %v1307, %v1325
    %v1327 = vpop.f32.mrf.mxu0
    %v1328 = vadd.f32 %v1309, %v1327
    %1329 = vmatmul.bf16.gmra.mxu0 %v80
    %v1330 = vpop.f32.mrf.mxu0
    %v1331 = vadd.f32 %v1312, %v1330
    %v1332 = vpop.f32.mrf.mxu0
    %v1333 = vadd.f32 %v1314, %v1332
    %1334 = vdwg.mxu0
    %1335 = vmatpush.bf16.msra.mxu0 %v1003
    %1336 = vmatpush.bf16.msra.mxu0 %v999
    %1337 = vmatpush.bf16.msra.mxu0 %v995
    %1338 = vmatpush.bf16.msra.mxu0 %v991
    %1339 = vmatpush.bf16.msra.mxu0 %v987
    %1340 = vmatpush.bf16.msra.mxu0 %v983
    %1341 = vmatpush.bf16.msra.mxu0 %v979
    %1342 = vmatpush.bf16.msra.mxu0 %v975
    %1343 = vmatmul.bf16.gmra.mxu0 %v74
    %v1344 = vpop.f32.mrf.mxu0
    %v1345 = vadd.f32 %v1326, %v1344
    %v1346 = vpop.f32.mrf.mxu0
    %v1347 = vadd.f32 %v1328, %v1346
    %1348 = vmatmul.bf16.gmra.mxu0 %v81
    %v1349 = vpop.f32.mrf.mxu0
    %v1350 = vadd.f32 %v1331, %v1349
    %v1351 = vpop.f32.mrf.mxu0
    %v1352 = vadd.f32 %v1333, %v1351
    %1353 = vdwg.mxu0
    %1354 = vmatpush.bf16.msra.mxu0 %v1035
    %1355 = vmatpush.bf16.msra.mxu0 %v1031
    %1356 = vmatpush.bf16.msra.mxu0 %v1027
    %1357 = vmatpush.bf16.msra.mxu0 %v1023
    %1358 = vmatpush.bf16.msra.mxu0 %v1019
    %1359 = vmatpush.bf16.msra.mxu0 %v1015
    %1360 = vmatpush.bf16.msra.mxu0 %v1011
    %1361 = vmatpush.bf16.msra.mxu0 %v1007
    %1362 = vmatmul.bf16.gmra.mxu0 %v75
    %v1363 = vpop.f32.mrf.mxu0
    %v1364 = vadd.f32 %v1345, %v1363
    %v1365 = vpop.f32.mrf.mxu0
    %v1366 = vadd.f32 %v1347, %v1365
    %1367 = vmatmul.bf16.gmra.mxu0 %v82
    %v1368 = vpop.f32.mrf.mxu0
    %v1369 = vadd.f32 %v1350, %v1368
    %v1370 = vpop.f32.mrf.mxu0
    %v1371 = vadd.f32 %v1352, %v1370
    %1372 = vdwg.mxu0
    %1373 = vmatpush.bf16.msra.mxu0 %v1067
    %1374 = vmatpush.bf16.msra.mxu0 %v1063
    %1375 = vmatpush.bf16.msra.mxu0 %v1059
    %1376 = vmatpush.bf16.msra.mxu0 %v1055
    %1377 = vmatpush.bf16.msra.mxu0 %v1051
    %1378 = vmatpush.bf16.msra.mxu0 %v1047
    %1379 = vmatpush.bf16.msra.mxu0 %v1043
    %1380 = vmatpush.bf16.msra.mxu0 %v1039
    %1381 = vmatmul.bf16.gmra.mxu0 %v76
    %v1382 = vpop.f32.mrf.mxu0
    %v1383 = vadd.f32 %v1364, %v1382
    %v1384 = vpop.f32.mrf.mxu0
    %v1385 = vadd.f32 %v1366, %v1384
    %1386 = vmatmul.bf16.gmra.mxu0 %v83
    %v1387 = vpop.f32.mrf.mxu0
    %v1388 = vadd.f32 %v1369, %v1387
    %v1389 = vpop.f32.mrf.mxu0
    %v1390 = vadd.f32 %v1371, %v1389
    %1391 = vdwg.mxu0
    %1392 = vmatpush.bf16.msra.mxu0 0
    %1393 = vmatpush.bf16.msra.mxu0 0
    %1394 = vmatpush.bf16.msra.mxu0 0
    %1395 = vmatpush.bf16.msra.mxu0 0
    %1396 = vmatpush.bf16.msra.mxu0 0
    %1397 = vmatpush.bf16.msra.mxu0 0
    %1398 = vmatpush.bf16.msra.mxu0 0
    %1399 = vmatpush.bf16.msra.mxu0 %v1071
    %1400 = vmatmul.bf16.gmra.mxu0 %v1273
    %v1401 = vpop.f32.mrf.mxu0
    %v1402 = vadd.f32 %v1383, %v1401
    %v1403 = vpop.f32.mrf.mxu0
    %v1404 = vadd.f32 %v1385, %v1403
    %1405 = vmatmul.bf16.gmra.mxu0 %v1276
    %v1406 = vpop.f32.mrf.mxu0
    %v1407 = vadd.f32 %v1388, %v1406
    %v1408 = vpop.f32.mrf.mxu0
    %v1409 = vadd.f32 %v1390, %v1408
    %1410 = vdwg.mxu0
    %1411 = vmatpush.bf16.msra.mxu0 %v908
    %1412 = vmatpush.bf16.msra.mxu0 %v904
    %1413 = vmatpush.bf16.msra.mxu0 %v900
    %1414 = vmatpush.bf16.msra.mxu0 %v896
    %1415 = vmatpush.bf16.msra.mxu0 %v892
    %1416 = vmatpush.bf16.msra.mxu0 %v888
    %1417 = vmatpush.bf16.msra.mxu0 %v884
    %1418 = vmatpush.bf16.msra.mxu0 %v880
    %1419 = vmatmul.bf16.gmra.mxu0 %v71
    %v1420 = vpop.f32.mrf.mxu0
    %v1421 = vadd.f32 %v284, %v1420
    %v1422 = vpop.f32.mrf.mxu0
    %v1423 = vadd.f32 %v284, %v1422
    %1424 = vmatmul.bf16.gmra.mxu0 %v78
    %v1425 = vpop.f32.mrf.mxu0
    %v1426 = vadd.f32 %v284, %v1425
    %v1427 = vpop.f32.mrf.mxu0
    %v1428 = vadd.f32 %v284, %v1427
    %1429 = vdwg.mxu0
    %1430 = vmatpush.bf16.msra.mxu0 %v940
    %1431 = vmatpush.bf16.msra.mxu0 %v936
    %1432 = vmatpush.bf16.msra.mxu0 %v932
    %1433 = vmatpush.bf16.msra.mxu0 %v928
    %1434 = vmatpush.bf16.msra.mxu0 %v924
    %1435 = vmatpush.bf16.msra.mxu0 %v920
    %1436 = vmatpush.bf16.msra.mxu0 %v916
    %1437 = vmatpush.bf16.msra.mxu0 %v912
    %1438 = vmatmul.bf16.gmra.mxu0 %v72
    %v1439 = vpop.f32.mrf.mxu0
    %v1440 = vadd.f32 %v1421, %v1439
    %v1441 = vpop.f32.mrf.mxu0
    %v1442 = vadd.f32 %v1423, %v1441
    %1443 = vmatmul.bf16.gmra.mxu0 %v79
    %v1444 = vpop.f32.mrf.mxu0
    %v1445 = vadd.f32 %v1426, %v1444
    %v1446 = vpop.f32.mrf.mxu0
    %v1447 = vadd.f32 %v1428, %v1446
    %1448 = vdwg.mxu0
    %1449 = vmatpush.bf16.msra.mxu0 %v972
    %1450 = vmatpush.bf16.msra.mxu0 %v968
    %1451 = vmatpush.bf16.msra.mxu0 %v964
    %1452 = vmatpush.bf16.msra.mxu0 %v960
    %1453 = vmatpush.bf16.msra.mxu0 %v956
    %1454 = vmatpush.bf16.msra.mxu0 %v952
    %1455 = vmatpush.bf16.msra.mxu0 %v948
    %1456 = vmatpush.bf16.msra.mxu0 %v944
    %1457 = vmatmul.bf16.gmra.mxu0 %v73
    %v1458 = vpop.f32.mrf.mxu0
    %v1459 = vadd.f32 %v1440, %v1458
    %v1460 = vpop.f32.mrf.mxu0
    %v1461 = vadd.f32 %v1442, %v1460
    %1462 = vmatmul.bf16.gmra.mxu0 %v80
    %v1463 = vpop.f32.mrf.mxu0
    %v1464 = vadd.f32 %v1445, %v1463
    %v1465 = vpop.f32.mrf.mxu0
    %v1466 = vadd.f32 %v1447, %v1465
    %1467 = vdwg.mxu0
    %1468 = vmatpush.bf16.msra.mxu0 %v1004
    %1469 = vmatpush.bf16.msra.mxu0 %v1000
    %1470 = vmatpush.bf16.msra.mxu0 %v996
    %1471 = vmatpush.bf16.msra.mxu0 %v992
    %1472 = vmatpush.bf16.msra.mxu0 %v988
    %1473 = vmatpush.bf16.msra.mxu0 %v984
    %1474 = vmatpush.bf16.msra.mxu0 %v980
    %1475 = vmatpush.bf16.msra.mxu0 %v976
    %1476 = vmatmul.bf16.gmra.mxu0 %v74
    %v1477 = vpop.f32.mrf.mxu0
    %v1478 = vadd.f32 %v1459, %v1477
    %v1479 = vpop.f32.mrf.mxu0
    %v1480 = vadd.f32 %v1461, %v1479
    %1481 = vmatmul.bf16.gmra.mxu0 %v81
    %v1482 = vpop.f32.mrf.mxu0
    %v1483 = vadd.f32 %v1464, %v1482
    %v1484 = vpop.f32.mrf.mxu0
    %v1485 = vadd.f32 %v1466, %v1484
    %1486 = vdwg.mxu0
    %1487 = vmatpush.bf16.msra.mxu0 %v1036
    %1488 = vmatpush.bf16.msra.mxu0 %v1032
    %1489 = vmatpush.bf16.msra.mxu0 %v1028
    %1490 = vmatpush.bf16.msra.mxu0 %v1024
    %1491 = vmatpush.bf16.msra.mxu0 %v1020
    %1492 = vmatpush.bf16.msra.mxu0 %v1016
    %1493 = vmatpush.bf16.msra.mxu0 %v1012
    %1494 = vmatpush.bf16.msra.mxu0 %v1008
    %1495 = vmatmul.bf16.gmra.mxu0 %v75
    %v1496 = vpop.f32.mrf.mxu0
    %v1497 = vadd.f32 %v1478, %v1496
    %v1498 = vpop.f32.mrf.mxu0
    %v1499 = vadd.f32 %v1480, %v1498
    %1500 = vmatmul.bf16.gmra.mxu0 %v82
    %v1501 = vpop.f32.mrf.mxu0
    %v1502 = vadd.f32 %v1483, %v1501
    %v1503 = vpop.f32.mrf.mxu0
    %v1504 = vadd.f32 %v1485, %v1503
    %1505 = vdwg.mxu0
    %1506 = vmatpush.bf16.msra.mxu0 %v1068
    %1507 = vmatpush.bf16.msra.mxu0 %v1064
    %1508 = vmatpush.bf16.msra.mxu0 %v1060
    %1509 = vmatpush.bf16.msra.mxu0 %v1056
    %1510 = vmatpush.bf16.msra.mxu0 %v1052
    %1511 = vmatpush.bf16.msra.mxu0 %v1048
    %1512 = vmatpush.bf16.msra.mxu0 %v1044
    %1513 = vmatpush.bf16.msra.mxu0 %v1040
    %1514 = vmatmul.bf16.gmra.mxu0 %v76
    %v1515 = vpop.f32.mrf.mxu0
    %v1516 = vadd.f32 %v1497, %v1515
    %v1517 = vpop.f32.mrf.mxu0
    %v1518 = vadd.f32 %v1499, %v1517
    %1519 = vmatmul.bf16.gmra.mxu0 %v83
    %v1520 = vpop.f32.mrf.mxu0
    %v1521 = vadd.f32 %v1502, %v1520
    %v1522 = vpop.f32.mrf.mxu0
    %v1523 = vadd.f32 %v1504, %v1522
    %1524 = vdwg.mxu0
    %1525 = vmatpush.bf16.msra.mxu0 0
    %1526 = vmatpush.bf16.msra.mxu0 0
    %1527 = vmatpush.bf16.msra.mxu0 0
    %1528 = vmatpush.bf16.msra.mxu0 0
    %1529 = vmatpush.bf16.msra.mxu0 0
    %1530 = vmatpush.bf16.msra.mxu0 0
    %1531 = vmatpush.bf16.msra.mxu0 0
    %1532 = vmatpush.bf16.msra.mxu0 %v1072
    %1533 = vmatmul.bf16.gmra.mxu0 %v1273
    %v1534 = vpop.f32.mrf.mxu0
    %v1535 = vadd.f32 %v1516, %v1534
    %v1536 = vpop.f32.mrf.mxu0
    %v1537 = vadd.f32 %v1518, %v1536
    %1538 = vmatmul.bf16.gmra.mxu0 %v1276
    %v1539 = vpop.f32.mrf.mxu0
    %v1540 = vadd.f32 %v1521, %v1539
    %v1541 = vpop.f32.mrf.mxu0
    %v1542 = vadd.f32 %v1523, %v1541
    %1543 = vdwg.mxu0
    %1544 = vmatpush.bf16.msra.mxu0 %v909
    %1545 = vmatpush.bf16.msra.mxu0 %v905
    %1546 = vmatpush.bf16.msra.mxu0 %v901
    %1547 = vmatpush.bf16.msra.mxu0 %v897
    %1548 = vmatpush.bf16.msra.mxu0 %v893
    %1549 = vmatpush.bf16.msra.mxu0 %v889
    %1550 = vmatpush.bf16.msra.mxu0 %v885
    %1551 = vmatpush.bf16.msra.mxu0 %v881
    %1552 = vmatmul.bf16.gmra.mxu0 %v71
    %v1553 = vpop.f32.mrf.mxu0
    %v1554 = vadd.f32 %v285, %v1553
    %v1555 = vpop.f32.mrf.mxu0
    %v1556 = vadd.f32 %v285, %v1555
    %1557 = vmatmul.bf16.gmra.mxu0 %v78
    %v1558 = vpop.f32.mrf.mxu0
    %v1559 = vadd.f32 %v285, %v1558
    %v1560 = vpop.f32.mrf.mxu0
    %v1561 = vadd.f32 %v285, %v1560
    %1562 = vdwg.mxu0
    %1563 = vmatpush.bf16.msra.mxu0 %v941
    %1564 = vmatpush.bf16.msra.mxu0 %v937
    %1565 = vmatpush.bf16.msra.mxu0 %v933
    %1566 = vmatpush.bf16.msra.mxu0 %v929
    %1567 = vmatpush.bf16.msra.mxu0 %v925
    %1568 = vmatpush.bf16.msra.mxu0 %v921
    %1569 = vmatpush.bf16.msra.mxu0 %v917
    %1570 = vmatpush.bf16.msra.mxu0 %v913
    %1571 = vmatmul.bf16.gmra.mxu0 %v72
    %v1572 = vpop.f32.mrf.mxu0
    %v1573 = vadd.f32 %v1554, %v1572
    %v1574 = vpop.f32.mrf.mxu0
    %v1575 = vadd.f32 %v1556, %v1574
    %1576 = vmatmul.bf16.gmra.mxu0 %v79
    %v1577 = vpop.f32.mrf.mxu0
    %v1578 = vadd.f32 %v1559, %v1577
    %v1579 = vpop.f32.mrf.mxu0
    %v1580 = vadd.f32 %v1561, %v1579
    %1581 = vdwg.mxu0
    %1582 = vmatpush.bf16.msra.mxu0 %v973
    %1583 = vmatpush.bf16.msra.mxu0 %v969
    %1584 = vmatpush.bf16.msra.mxu0 %v965
    %1585 = vmatpush.bf16.msra.mxu0 %v961
    %1586 = vmatpush.bf16.msra.mxu0 %v957
    %1587 = vmatpush.bf16.msra.mxu0 %v953
    %1588 = vmatpush.bf16.msra.mxu0 %v949
    %1589 = vmatpush.bf16.msra.mxu0 %v945
    %1590 = vmatmul.bf16.gmra.mxu0 %v73
    %v1591 = vpop.f32.mrf.mxu0
    %v1592 = vadd.f32 %v1573, %v1591
    %v1593 = vpop.f32.mrf.mxu0
    %v1594 = vadd.f32 %v1575, %v1593
    %1595 = vmatmul.bf16.gmra.mxu0 %v80
    %v1596 = vpop.f32.mrf.mxu0
    %v1597 = vadd.f32 %v1578, %v1596
    %v1598 = vpop.f32.mrf.mxu0
    %v1599 = vadd.f32 %v1580, %v1598
    %1600 = vdwg.mxu0
    %1601 = vmatpush.bf16.msra.mxu0 %v1005
    %1602 = vmatpush.bf16.msra.mxu0 %v1001
    %1603 = vmatpush.bf16.msra.mxu0 %v997
    %1604 = vmatpush.bf16.msra.mxu0 %v993
    %1605 = vmatpush.bf16.msra.mxu0 %v989
    %1606 = vmatpush.bf16.msra.mxu0 %v985
    %1607 = vmatpush.bf16.msra.mxu0 %v981
    %1608 = vmatpush.bf16.msra.mxu0 %v977
    %1609 = vmatmul.bf16.gmra.mxu0 %v74
    %v1610 = vpop.f32.mrf.mxu0
    %v1611 = vadd.f32 %v1592, %v1610
    %v1612 = vpop.f32.mrf.mxu0
    %v1613 = vadd.f32 %v1594, %v1612
    %1614 = vmatmul.bf16.gmra.mxu0 %v81
    %v1615 = vpop.f32.mrf.mxu0
    %v1616 = vadd.f32 %v1597, %v1615
    %v1617 = vpop.f32.mrf.mxu0
    %v1618 = vadd.f32 %v1599, %v1617
    %1619 = vdwg.mxu0
    %1620 = vmatpush.bf16.msra.mxu0 %v1037
    %1621 = vmatpush.bf16.msra.mxu0 %v1033
    %1622 = vmatpush.bf16.msra.mxu0 %v1029
    %1623 = vmatpush.bf16.msra.mxu0 %v1025
    %1624 = vmatpush.bf16.msra.mxu0 %v1021
    %1625 = vmatpush.bf16.msra.mxu0 %v1017
    %1626 = vmatpush.bf16.msra.mxu0 %v1013
    %1627 = vmatpush.bf16.msra.mxu0 %v1009
    %1628 = vmatmul.bf16.gmra.mxu0 %v75
    %v1629 = vpop.f32.mrf.mxu0
    %v1630 = vadd.f32 %v1611, %v1629
    %v1631 = vpop.f32.mrf.mxu0
    %v1632 = vadd.f32 %v1613, %v1631
    %1633 = vmatmul.bf16.gmra.mxu0 %v82
    %v1634 = vpop.f32.mrf.mxu0
    %v1635 = vadd.f32 %v1616, %v1634
    %v1636 = vpop.f32.mrf.mxu0
    %v1637 = vadd.f32 %v1618, %v1636
    %1638 = vdwg.mxu0
    %1639 = vmatpush.bf16.msra.mxu0 %v1069
    %1640 = vmatpush.bf16.msra.mxu0 %v1065
    %1641 = vmatpush.bf16.msra.mxu0 %v1061
    %1642 = vmatpush.bf16.msra.mxu0 %v1057
    %1643 = vmatpush.bf16.msra.mxu0 %v1053
    %1644 = vmatpush.bf16.msra.mxu0 %v1049
    %1645 = vmatpush.bf16.msra.mxu0 %v1045
    %1646 = vmatpush.bf16.msra.mxu0 %v1041
    %1647 = vmatmul.bf16.gmra.mxu0 %v76
    %v1648 = vpop.f32.mrf.mxu0
    %v1649 = vadd.f32 %v1630, %v1648
    %v1650 = vpop.f32.mrf.mxu0
    %v1651 = vadd.f32 %v1632, %v1650
    %1652 = vmatmul.bf16.gmra.mxu0 %v83
    %v1653 = vpop.f32.mrf.mxu0
    %v1654 = vadd.f32 %v1635, %v1653
    %v1655 = vpop.f32.mrf.mxu0
    %v1656 = vadd.f32 %v1637, %v1655
    %1657 = vdwg.mxu0
    %1658 = vmatpush.bf16.msra.mxu0 0
    %1659 = vmatpush.bf16.msra.mxu0 0
    %1660 = vmatpush.bf16.msra.mxu0 0
    %1661 = vmatpush.bf16.msra.mxu0 0
    %1662 = vmatpush.bf16.msra.mxu0 0
    %1663 = vmatpush.bf16.msra.mxu0 0
    %1664 = vmatpush.bf16.msra.mxu0 0
    %1665 = vmatpush.bf16.msra.mxu0 %v1073
    %1666 = vmatmul.bf16.gmra.mxu0 %v1273
    %v1667 = vpop.f32.mrf.mxu0
    %v1668 = vadd.f32 %v1649, %v1667
    %v1669 = vpop.f32.mrf.mxu0
    %v1670 = vadd.f32 %v1651, %v1669
    %1671 = vmatmul.bf16.gmra.mxu0 %v1276
    %v1672 = vpop.f32.mrf.mxu0
    %v1673 = vadd.f32 %v1654, %v1672
    %v1674 = vpop.f32.mrf.mxu0
    %v1675 = vadd.f32 %v1656, %v1674
    %1676 = vdwg.mxu0
    %1677 = vmatpush.bf16.msra.mxu0 %v910
    %1678 = vmatpush.bf16.msra.mxu0 %v906
    %1679 = vmatpush.bf16.msra.mxu0 %v902
    %1680 = vmatpush.bf16.msra.mxu0 %v898
    %1681 = vmatpush.bf16.msra.mxu0 %v894
    %1682 = vmatpush.bf16.msra.mxu0 %v890
    %1683 = vmatpush.bf16.msra.mxu0 %v886
    %1684 = vmatpush.bf16.msra.mxu0 %v882
    %1685 = vmatmul.bf16.gmra.mxu0 %v71
    %v1686 = vpop.f32.mrf.mxu0
    %v1687 = vadd.f32 %v286, %v1686
    %v1688 = vpop.f32.mrf.mxu0
    %v1689 = vadd.f32 %v286, %v1688
    %1690 = vmatmul.bf16.gmra.mxu0 %v78
    %v1691 = vpop.f32.mrf.mxu0
    %v1692 = vadd.f32 %v286, %v1691
    %v1693 = vpop.f32.mrf.mxu0
    %v1694 = vadd.f32 %v286, %v1693
    %1695 = vdwg.mxu0
    %1696 = vmatpush.bf16.msra.mxu0 %v942
    %1697 = vmatpush.bf16.msra.mxu0 %v938
    %1698 = vmatpush.bf16.msra.mxu0 %v934
    %1699 = vmatpush.bf16.msra.mxu0 %v930
    %1700 = vmatpush.bf16.msra.mxu0 %v926
    %1701 = vmatpush.bf16.msra.mxu0 %v922
    %1702 = vmatpush.bf16.msra.mxu0 %v918
    %1703 = vmatpush.bf16.msra.mxu0 %v914
    %1704 = vmatmul.bf16.gmra.mxu0 %v72
    %v1705 = vpop.f32.mrf.mxu0
    %v1706 = vadd.f32 %v1687, %v1705
    %v1707 = vpop.f32.mrf.mxu0
    %v1708 = vadd.f32 %v1689, %v1707
    %1709 = vmatmul.bf16.gmra.mxu0 %v79
    %v1710 = vpop.f32.mrf.mxu0
    %v1711 = vadd.f32 %v1692, %v1710
    %v1712 = vpop.f32.mrf.mxu0
    %v1713 = vadd.f32 %v1694, %v1712
    %1714 = vdwg.mxu0
    %1715 = vmatpush.bf16.msra.mxu0 %v974
    %1716 = vmatpush.bf16.msra.mxu0 %v970
    %1717 = vmatpush.bf16.msra.mxu0 %v966
    %1718 = vmatpush.bf16.msra.mxu0 %v962
    %1719 = vmatpush.bf16.msra.mxu0 %v958
    %1720 = vmatpush.bf16.msra.mxu0 %v954
    %1721 = vmatpush.bf16.msra.mxu0 %v950
    %1722 = vmatpush.bf16.msra.mxu0 %v946
    %1723 = vmatmul.bf16.gmra.mxu0 %v73
    %v1724 = vpop.f32.mrf.mxu0
    %v1725 = vadd.f32 %v1706, %v1724
    %v1726 = vpop.f32.mrf.mxu0
    %v1727 = vadd.f32 %v1708, %v1726
    %1728 = vmatmul.bf16.gmra.mxu0 %v80
    %v1729 = vpop.f32.mrf.mxu0
    %v1730 = vadd.f32 %v1711, %v1729
    %v1731 = vpop.f32.mrf.mxu0
    %v1732 = vadd.f32 %v1713, %v1731
    %1733 = vdwg.mxu0
    %1734 = vmatpush.bf16.msra.mxu0 %v1006
    %1735 = vmatpush.bf16.msra.mxu0 %v1002
    %1736 = vmatpush.bf16.msra.mxu0 %v998
    %1737 = vmatpush.bf16.msra.mxu0 %v994
    %1738 = vmatpush.bf16.msra.mxu0 %v990
    %1739 = vmatpush.bf16.msra.mxu0 %v986
    %1740 = vmatpush.bf16.msra.mxu0 %v982
    %1741 = vmatpush.bf16.msra.mxu0 %v978
    %1742 = vmatmul.bf16.gmra.mxu0 %v74
    %v1743 = vpop.f32.mrf.mxu0
    %v1744 = vadd.f32 %v1725, %v1743
    %v1745 = vpop.f32.mrf.mxu0
    %v1746 = vadd.f32 %v1727, %v1745
    %1747 = vmatmul.bf16.gmra.mxu0 %v81
    %v1748 = vpop.f32.mrf.mxu0
    %v1749 = vadd.f32 %v1730, %v1748
    %v1750 = vpop.f32.mrf.mxu0
    %v1751 = vadd.f32 %v1732, %v1750
    %1752 = vdwg.mxu0
    %1753 = vmatpush.bf16.msra.mxu0 %v1038
    %1754 = vmatpush.bf16.msra.mxu0 %v1034
    %1755 = vmatpush.bf16.msra.mxu0 %v1030
    %1756 = vmatpush.bf16.msra.mxu0 %v1026
    %1757 = vmatpush.bf16.msra.mxu0 %v1022
    %1758 = vmatpush.bf16.msra.mxu0 %v1018
    %1759 = vmatpush.bf16.msra.mxu0 %v1014
    %1760 = vmatpush.bf16.msra.mxu0 %v1010
    %1761 = vmatmul.bf16.gmra.mxu0 %v75
    %v1762 = vpop.f32.mrf.mxu0
    %v1763 = vadd.f32 %v1744, %v1762
    %v1764 = vpop.f32.mrf.mxu0
    %v1765 = vadd.f32 %v1746, %v1764
    %1766 = vmatmul.bf16.gmra.mxu0 %v82
    %v1767 = vpop.f32.mrf.mxu0
    %v1768 = vadd.f32 %v1749, %v1767
    %v1769 = vpop.f32.mrf.mxu0
    %v1770 = vadd.f32 %v1751, %v1769
    %1771 = vdwg.mxu0
    %1772 = vmatpush.bf16.msra.mxu0 %v1070
    %1773 = vmatpush.bf16.msra.mxu0 %v1066
    %1774 = vmatpush.bf16.msra.mxu0 %v1062
    %1775 = vmatpush.bf16.msra.mxu0 %v1058
    %1776 = vmatpush.bf16.msra.mxu0 %v1054
    %1777 = vmatpush.bf16.msra.mxu0 %v1050
    %1778 = vmatpush.bf16.msra.mxu0 %v1046
    %1779 = vmatpush.bf16.msra.mxu0 %v1042
    %1780 = vmatmul.bf16.gmra.mxu0 %v76
    %v1781 = vpop.f32.mrf.mxu0
    %v1782 = vadd.f32 %v1763, %v1781
    %v1783 = vpop.f32.mrf.mxu0
    %v1784 = vadd.f32 %v1765, %v1783
    %1785 = vmatmul.bf16.gmra.mxu0 %v83
    %v1786 = vpop.f32.mrf.mxu0
    %v1787 = vadd.f32 %v1768, %v1786
    %v1788 = vpop.f32.mrf.mxu0
    %v1789 = vadd.f32 %v1770, %v1788
    %1790 = vdwg.mxu0
    %1791 = vmatpush.bf16.msra.mxu0 0
    %1792 = vmatpush.bf16.msra.mxu0 0
    %1793 = vmatpush.bf16.msra.mxu0 0
    %1794 = vmatpush.bf16.msra.mxu0 0
    %1795 = vmatpush.bf16.msra.mxu0 0
    %1796 = vmatpush.bf16.msra.mxu0 0
    %1797 = vmatpush.bf16.msra.mxu0 0
    %1798 = vmatpush.bf16.msra.mxu0 %v1074
    %1799 = vmatmul.bf16.gmra.mxu0 %v1273
    %v1800 = vpop.f32.mrf.mxu0
    %v1801 = vadd.f32 %v1782, %v1800
    %v1802 = vpop.f32.mrf.mxu0
    %v1803 = vadd.f32 %v1784, %v1802
    %1804 = vmatmul.bf16.gmra.mxu0 %v1276
    %v1805 = vpop.f32.mrf.mxu0
    %v1806 = vadd.f32 %v1787, %v1805
    %v1807 = vpop.f32.mrf.mxu0
    %v1808 = vadd.f32 %v1789, %v1807
    %1809 = vdwg.mxu0
    %v1810 = vmax.f32 %v1402, 0.0
    %v1811 = vmax.f32 %v1535, 0.0
    %v1812 = vmax.f32 %v1668, 0.0
    %v1813 = vmax.f32 %v1801, 0.0
    %v1814 = vmax.f32 %v1404, 0.0
    %v1815 = vmax.f32 %v1537, 0.0
    %v1816 = vmax.f32 %v1670, 0.0
    %v1817 = vmax.f32 %v1803, 0.0
    %v1818 = vmax.f32 %v1407, 0.0
    %v1819 = vmax.f32 %v1540, 0.0
    %v1820 = vmax.f32 %v1673, 0.0
    %v1821 = vmax.f32 %v1806, 0.0
    %v1822 = vmax.f32 %v1409, 0.0
    %v1823 = vmax.f32 %v1542, 0.0
    %v1824 = vmax.f32 %v1675, 0.0
    %v1825 = vmax.f32 %v1808, 0.0
    %v1826 = vpack.c.bf16 %v1814, %v1810
    %v1827 = vpack.c.bf16 %v1815, %v1811
    %v1828 = vpack.c.bf16 %v1816, %v1812
    %v1829 = vpack.c.bf16 %v1817, %v1813
    %v1830 = vpack.c.bf16 %v1822, %v1818
    %v1831 = vpack.c.bf16 %v1823, %v1819
    %v1832 = vpack.c.bf16 %v1824, %v1820
    %v1833 = vpack.c.bf16 %v1825, %v1821
    %v1834 = vld [vmem:[%s3] sm:$0xf]
    %v1835 = vld [vmem:[%s3 + $0x4] sm:$0xf]
    %v1836 = vld [vmem:[%s3 + $0x8] sm:$0xf]
    %v1837 = vld [vmem:[%s3 + $0xc] sm:$0xf]
    %v1838 = vld [vmem:[%s3 + $0x10] sm:$0xf]
    %v1839 = vld [vmem:[%s3 + $0x14] sm:$0xf]
    %v1840 = vld [vmem:[%s3 + $0x18] sm:$0xf]
    %v1841 = vld [vmem:[%s3 + $0x1c] sm:$0xf]
    %v1842 = vld [vmem:[%s3 + $0x20] sm:$0xf]
    %v1843 = vld [vmem:[%s3 + $0x24] sm:$0xf]
    %v1844 = vld [vmem:[%s3 + $0x28] sm:$0xf]
    %v1845 = vld [vmem:[%s3 + $0x2c] sm:$0xf]
    %v1846 = vld [vmem:[%s3 + $0x30] sm:$0xf]
    %v1847 = vld [vmem:[%s3 + $0x34] sm:$0xf]
    %v1848 = vld [vmem:[%s3 + $0x38] sm:$0xf]
    %v1849 = vld [vmem:[%s3 + $0x3c] sm:$0xf]
    %v1850 = vld [vmem:[%s3 + $0x40] sm:$0xf]
    %v1851 = vld [vmem:[%s3 + $0x44] sm:$0xf]
    %v1852 = vld [vmem:[%s3 + $0x48] sm:$0xf]
    %v1853 = vld [vmem:[%s3 + $0x4c] sm:$0xf]
    %v1854 = vld [vmem:[%s3 + $0x50] sm:$0xf]
    %v1855 = vld [vmem:[%s3 + $0x54] sm:$0xf]
    %v1856 = vld [vmem:[%s3 + $0x58] sm:$0xf]
    %v1857 = vld [vmem:[%s3 + $0x5c] sm:$0xf]
    %v1858 = vld [vmem:[%s3 + $0x60] sm:$0xf]
    %v1859 = vld [vmem:[%s3 + $0x64] sm:$0xf]
    %v1860 = vld [vmem:[%s3 + $0x68] sm:$0xf]
    %v1861 = vld [vmem:[%s3 + $0x6c] sm:$0xf]
    %v1862 = vld [vmem:[%s3 + $0x70] sm:$0xf]
    %v1863 = vld [vmem:[%s3 + $0x74] sm:$0xf]
    %v1864 = vld [vmem:[%s3 + $0x78] sm:$0xf]
    %v1865 = vld [vmem:[%s3 + $0x7c] sm:$0xf]
    %v1866 = vld [vmem:[%s3 + $0x80] sm:$0xf]
    %v1867 = vld [vmem:[%s3 + $0x84] sm:$0xf]
    %v1868 = vld [vmem:[%s3 + $0x88] sm:$0xf]
    %v1869 = vld [vmem:[%s3 + $0x8c] sm:$0xf]
    %v1870 = vld [vmem:[%s3 + $0x90] sm:$0xf]
    %v1871 = vld [vmem:[%s3 + $0x94] sm:$0xf]
    %v1872 = vld [vmem:[%s3 + $0x98] sm:$0xf]
    %v1873 = vld [vmem:[%s3 + $0x9c] sm:$0xf]
    %v1874 = vld [vmem:[%s3 + $0xa0] sm:$0xf]
    %v1875 = vld [vmem:[%s3 + $0xa4] sm:$0xf]
    %v1876 = vld [vmem:[%s3 + $0xa8] sm:$0xf]
    %v1877 = vld [vmem:[%s3 + $0xac] sm:$0xf]
    %v1878 = vld [vmem:[%s3 + $0xb0] sm:$0xf]
    %v1879 = vld [vmem:[%s3 + $0xb4] sm:$0xf]
    %v1880 = vld [vmem:[%s3 + $0xb8] sm:$0xf]
    %v1881 = vld [vmem:[%s3 + $0xbc] sm:$0xf]
    %v1882 = vld [vmem:[%s3 + $0xc0] sm:$0xf]
    %v1883 = vld [vmem:[%s3 + $0xc4] sm:$0xf]
    %v1884 = vld [vmem:[%s3 + $0xc8] sm:$0xf]
    %v1885 = vld [vmem:[%s3 + $0xcc] sm:$0xf]
    %v1886 = vld [vmem:[%s3 + $0xd0] sm:$0xf]
    %v1887 = vld [vmem:[%s3 + $0xd4] sm:$0xf]
    %v1888 = vld [vmem:[%s3 + $0xd8] sm:$0xf]
    %v1889 = vld [vmem:[%s3 + $0xdc] sm:$0xf]
    %v1890 = vld [vmem:[%s3 + $0xe0] sm:$0xf]
    %v1891 = vld [vmem:[%s3 + $0xe4] sm:$0xf]
    %v1892 = vld [vmem:[%s3 + $0xe8] sm:$0xf]
    %v1893 = vld [vmem:[%s3 + $0xec] sm:$0xf]
    %v1894 = vld [vmem:[%s3 + $0xf0] sm:$0xf]
    %v1895 = vld [vmem:[%s3 + $0xf4] sm:$0xf]
    %v1896 = vld [vmem:[%s3 + $0xf8] sm:$0xf]
    %v1897 = vld [vmem:[%s3 + $0xfc] sm:$0xf]
    %v1898 = vld [vmem:[%s4] sm:$0x1]
    %v1900 = vperm.slane %v1898, 0
    %v1966 = vunpack.c.l.b16 %v1834
    %v1967 = vunpack.c.l.b16 %v1835
    %v1968 = vunpack.c.l.b16 %v1836
    %v1969 = vunpack.c.l.b16 %v1837
    %v1970 = vunpack.c.l.b16 %v1838
    %v1971 = vunpack.c.l.b16 %v1839
    %v1972 = vunpack.c.l.b16 %v1840
    %v1973 = vunpack.c.l.b16 %v1841
    %v1974 = vunpack.c.l.b16 %v1842
    %v1975 = vunpack.c.l.b16 %v1843
    %v1976 = vunpack.c.l.b16 %v1844
    %v1977 = vunpack.c.l.b16 %v1845
    %v1978 = vunpack.c.l.b16 %v1846
    %v1979 = vunpack.c.l.b16 %v1847
    %v1980 = vunpack.c.l.b16 %v1848
    %v1981 = vunpack.c.l.b16 %v1849
    %v1982 = vunpack.c.l.b16 %v1850
    %v1983 = vunpack.c.l.b16 %v1851
    %v1984 = vunpack.c.l.b16 %v1852
    %v1985 = vunpack.c.l.b16 %v1853
    %v1986 = vunpack.c.l.b16 %v1854
    %v1987 = vunpack.c.l.b16 %v1855
    %v1988 = vunpack.c.l.b16 %v1856
    %v1989 = vunpack.c.l.b16 %v1857
    %v1990 = vunpack.c.l.b16 %v1858
    %v1991 = vunpack.c.l.b16 %v1859
    %v1992 = vunpack.c.l.b16 %v1860
    %v1993 = vunpack.c.l.b16 %v1861
    %v1994 = vunpack.c.l.b16 %v1862
    %v1995 = vunpack.c.l.b16 %v1863
    %v1996 = vunpack.c.l.b16 %v1864
    %v1997 = vunpack.c.l.b16 %v1865
    %v1998 = vunpack.c.l.b16 %v1866
    %v1999 = vunpack.c.l.b16 %v1867
    %v2000 = vunpack.c.l.b16 %v1868
    %v2001 = vunpack.c.l.b16 %v1869
    %v2002 = vunpack.c.l.b16 %v1870
    %v2003 = vunpack.c.l.b16 %v1871
    %v2004 = vunpack.c.l.b16 %v1872
    %v2005 = vunpack.c.l.b16 %v1873
    %v2006 = vunpack.c.l.b16 %v1874
    %v2007 = vunpack.c.l.b16 %v1875
    %v2008 = vunpack.c.l.b16 %v1876
    %v2009 = vunpack.c.l.b16 %v1877
    %v2010 = vunpack.c.l.b16 %v1878
    %v2011 = vunpack.c.l.b16 %v1879
    %v2012 = vunpack.c.l.b16 %v1880
    %v2013 = vunpack.c.l.b16 %v1881
    %v2014 = vunpack.c.l.b16 %v1882
    %v2015 = vunpack.c.l.b16 %v1883
    %v2016 = vunpack.c.l.b16 %v1884
    %v2017 = vunpack.c.l.b16 %v1885
    %v2018 = vunpack.c.l.b16 %v1886
    %v2019 = vunpack.c.l.b16 %v1887
    %v2020 = vunpack.c.l.b16 %v1888
    %v2021 = vunpack.c.l.b16 %v1889
    %v2022 = vunpack.c.l.b16 %v1890
    %v2023 = vunpack.c.l.b16 %v1891
    %v2024 = vunpack.c.l.b16 %v1892
    %v2025 = vunpack.c.l.b16 %v1893
    %v2026 = vunpack.c.l.b16 %v1894
    %v2027 = vunpack.c.l.b16 %v1895
    %v2028 = vunpack.c.l.b16 %v1896
    %v2029 = vunpack.c.l.b16 %v1897
    %v2030 = vpack.c.b16 %v1967, %v1966
    %v2031 = vpack.c.b16 %v1969, %v1968
    %v2032 = vpack.c.b16 %v1971, %v1970
    %v2033 = vpack.c.b16 %v1973, %v1972
    %v2034 = vpack.c.b16 %v1975, %v1974
    %v2035 = vpack.c.b16 %v1977, %v1976
    %v2036 = vpack.c.b16 %v1979, %v1978
    %v2037 = vpack.c.b16 %v1981, %v1980
    %v2038 = vpack.c.b16 %v1983, %v1982
    %v2039 = vpack.c.b16 %v1985, %v1984
    %v2040 = vpack.c.b16 %v1987, %v1986
    %v2041 = vpack.c.b16 %v1989, %v1988
    %v2042 = vpack.c.b16 %v1991, %v1990
    %v2043 = vpack.c.b16 %v1993, %v1992
    %v2044 = vpack.c.b16 %v1995, %v1994
    %v2045 = vpack.c.b16 %v1997, %v1996
    %v2046 = vpack.c.b16 %v1999, %v1998
    %v2047 = vpack.c.b16 %v2001, %v2000
    %v2048 = vpack.c.b16 %v2003, %v2002
    %v2049 = vpack.c.b16 %v2005, %v2004
    %v2050 = vpack.c.b16 %v2007, %v2006
    %v2051 = vpack.c.b16 %v2009, %v2008
    %v2052 = vpack.c.b16 %v2011, %v2010
    %v2053 = vpack.c.b16 %v2013, %v2012
    %v2054 = vpack.c.b16 %v2015, %v2014
    %v2055 = vpack.c.b16 %v2017, %v2016
    %v2056 = vpack.c.b16 %v2019, %v2018
    %v2057 = vpack.c.b16 %v2021, %v2020
    %v2058 = vpack.c.b16 %v2023, %v2022
    %v2059 = vpack.c.b16 %v2025, %v2024
    %v2060 = vpack.c.b16 %v2027, %v2026
    %v2061 = vpack.c.b16 %v2029, %v2028
    %2094 = vmatpush.bf16.msra.mxu0 %v2037
    %2095 = vmatpush.bf16.msra.mxu0 %v2036
    %2096 = vmatpush.bf16.msra.mxu0 %v2035
    %2097 = vmatpush.bf16.msra.mxu0 %v2034
    %2098 = vmatpush.bf16.msra.mxu0 %v2033
    %2099 = vmatpush.bf16.msra.mxu0 %v2032
    %2100 = vmatpush.bf16.msra.mxu0 %v2031
    %2101 = vmatpush.bf16.msra.mxu0 %v2030
    %2102 = vmatmul.bf16.gmra.mxu0 %v1826
    %v2103 = vpop.f32.mrf.mxu0
    %v2104 = vadd.f32 %v1900, %v2103
    %v2105 = vpop.f32.mrf.mxu0
    %v2106 = vadd.f32 %v1900, %v2105
    %2107 = vmatmul.bf16.gmra.mxu0 %v1830
    %v2108 = vpop.f32.mrf.mxu0
    %v2109 = vadd.f32 %v1900, %v2108
    %v2110 = vpop.f32.mrf.mxu0
    %v2111 = vadd.f32 %v1900, %v2110
    %2112 = vdwg.mxu0
    %2113 = vmatpush.bf16.msra.mxu0 %v2045
    %2114 = vmatpush.bf16.msra.mxu0 %v2044
    %2115 = vmatpush.bf16.msra.mxu0 %v2043
    %2116 = vmatpush.bf16.msra.mxu0 %v2042
    %2117 = vmatpush.bf16.msra.mxu0 %v2041
    %2118 = vmatpush.bf16.msra.mxu0 %v2040
    %2119 = vmatpush.bf16.msra.mxu0 %v2039
    %2120 = vmatpush.bf16.msra.mxu0 %v2038
    %2121 = vmatmul.bf16.gmra.mxu0 %v1827
    %v2122 = vpop.f32.mrf.mxu0
    %v2123 = vadd.f32 %v2104, %v2122
    %v2124 = vpop.f32.mrf.mxu0
    %v2125 = vadd.f32 %v2106, %v2124
    %2126 = vmatmul.bf16.gmra.mxu0 %v1831
    %v2127 = vpop.f32.mrf.mxu0
    %v2128 = vadd.f32 %v2109, %v2127
    %v2129 = vpop.f32.mrf.mxu0
    %v2130 = vadd.f32 %v2111, %v2129
    %2131 = vdwg.mxu0
    %2132 = vmatpush.bf16.msra.mxu0 %v2053
    %2133 = vmatpush.bf16.msra.mxu0 %v2052
    %2134 = vmatpush.bf16.msra.mxu0 %v2051
    %2135 = vmatpush.bf16.msra.mxu0 %v2050
    %2136 = vmatpush.bf16.msra.mxu0 %v2049
    %2137 = vmatpush.bf16.msra.mxu0 %v2048
    %2138 = vmatpush.bf16.msra.mxu0 %v2047
    %2139 = vmatpush.bf16.msra.mxu0 %v2046
    %2140 = vmatmul.bf16.gmra.mxu0 %v1828
    %v2141 = vpop.f32.mrf.mxu0
    %v2142 = vadd.f32 %v2123, %v2141
    %v2143 = vpop.f32.mrf.mxu0
    %v2144 = vadd.f32 %v2125, %v2143
    %2145 = vmatmul.bf16.gmra.mxu0 %v1832
    %v2146 = vpop.f32.mrf.mxu0
    %v2147 = vadd.f32 %v2128, %v2146
    %v2148 = vpop.f32.mrf.mxu0
    %v2149 = vadd.f32 %v2130, %v2148
    %2150 = vdwg.mxu0
    %2151 = vmatpush.bf16.msra.mxu0 %v2061
    %2152 = vmatpush.bf16.msra.mxu0 %v2060
    %2153 = vmatpush.bf16.msra.mxu0 %v2059
    %2154 = vmatpush.bf16.msra.mxu0 %v2058
    %2155 = vmatpush.bf16.msra.mxu0 %v2057
    %2156 = vmatpush.bf16.msra.mxu0 %v2056
    %2157 = vmatpush.bf16.msra.mxu0 %v2055
    %2158 = vmatpush.bf16.msra.mxu0 %v2054
    %2159 = vmatmul.bf16.gmra.mxu0 %v1829
    %v2160 = vpop.f32.mrf.mxu0
    %v2161 = vadd.f32 %v2142, %v2160
    %v2162 = vpop.f32.mrf.mxu0
    %v2163 = vadd.f32 %v2144, %v2162
    %2164 = vmatmul.bf16.gmra.mxu0 %v1833
    %v2165 = vpop.f32.mrf.mxu0
    %v2166 = vadd.f32 %v2147, %v2165
    %v2167 = vpop.f32.mrf.mxu0
    %v2168 = vadd.f32 %v2149, %v2167
    %2169 = vdwg.mxu0
    %v2170 = vmax.f32 %v2161, 0.0
    %v2171 = vmax.f32 %v2163, 0.0
    %v2172 = vmax.f32 %v2166, 0.0
    %v2173 = vmax.f32 %v2168, 0.0
    %v2174 = vpack.c.bf16 %v2171, %v2170
    %v2175 = vpack.c.bf16 %v2173, %v2172
    %v2176 = vld [vmem:[%s5] sm:$0xf]
    %v2177 = vld [vmem:[%s5 + $0x4] sm:$0xf]
    %v2178 = vld [vmem:[%s5 + $0x8] sm:$0xf]
    %v2179 = vld [vmem:[%s5 + $0xc] sm:$0xf]
    %v2180 = vld [vmem:[%s5 + $0x10] sm:$0xf]
    %v2181 = vld [vmem:[%s5 + $0x14] sm:$0xf]
    %v2182 = vld [vmem:[%s5 + $0x18] sm:$0xf]
    %v2183 = vld [vmem:[%s5 + $0x1c] sm:$0xf]
    %v2184 = vld [vmem:[%s5 + $0x20] sm:$0xf]
    %v2185 = vld [vmem:[%s5 + $0x24] sm:$0xf]
    %v2186 = vld [vmem:[%s5 + $0x28] sm:$0xf]
    %v2187 = vld [vmem:[%s5 + $0x2c] sm:$0xf]
    %v2188 = vld [vmem:[%s5 + $0x30] sm:$0xf]
    %v2189 = vld [vmem:[%s5 + $0x34] sm:$0xf]
    %v2190 = vld [vmem:[%s5 + $0x38] sm:$0xf]
    %v2191 = vld [vmem:[%s5 + $0x3c] sm:$0xf]
    %v2192 = vld [vmem:[%s6] sm:$0x1]
    %v2194 = vperm.slane %v2192, 0
    %v2212 = vunpack.c.l.b16 %v2176
    %v2213 = vunpack.c.l.b16 %v2177
    %v2214 = vunpack.c.l.b16 %v2178
    %v2215 = vunpack.c.l.b16 %v2179
    %v2216 = vunpack.c.l.b16 %v2180
    %v2217 = vunpack.c.l.b16 %v2181
    %v2218 = vunpack.c.l.b16 %v2182
    %v2219 = vunpack.c.l.b16 %v2183
    %v2220 = vunpack.c.l.b16 %v2184
    %v2221 = vunpack.c.l.b16 %v2185
    %v2222 = vunpack.c.l.b16 %v2186
    %v2223 = vunpack.c.l.b16 %v2187
    %v2224 = vunpack.c.l.b16 %v2188
    %v2225 = vunpack.c.l.b16 %v2189
    %v2226 = vunpack.c.l.b16 %v2190
    %v2227 = vunpack.c.l.b16 %v2191
    %v2228 = vpack.c.b16 %v2213, %v2212
    %v2229 = vpack.c.b16 %v2215, %v2214
    %v2230 = vpack.c.b16 %v2217, %v2216
    %v2231 = vpack.c.b16 %v2219, %v2218
    %v2232 = vpack.c.b16 %v2221, %v2220
    %v2233 = vpack.c.b16 %v2223, %v2222
    %v2234 = vpack.c.b16 %v2225, %v2224
    %v2235 = vpack.c.b16 %v2227, %v2226
    %2244 = vmatpush.bf16.msra.mxu0 %v2235
    %2245 = vmatpush.bf16.msra.mxu0 %v2234
    %2246 = vmatpush.bf16.msra.mxu0 %v2233
    %2247 = vmatpush.bf16.msra.mxu0 %v2232
    %2248 = vmatpush.bf16.msra.mxu0 %v2231
    %2249 = vmatpush.bf16.msra.mxu0 %v2230
    %2250 = vmatpush.bf16.msra.mxu0 %v2229
    %2251 = vmatpush.bf16.msra.mxu0 %v2228
    %2252 = vmatmul.bf16.gmra.mxu0 %v2174
    %v2253 = vpop.f32.mrf.mxu0
    %v2254 = vadd.f32 %v2194, %v2253
    %v2255 = vpop.f32.mrf.mxu0
    %v2256 = vadd.f32 %v2194, %v2255
    %2257 = vmatmul.bf16.gmra.mxu0 %v2175
    %v2258 = vpop.f32.mrf.mxu0
    %v2259 = vadd.f32 %v2194, %v2258
    %v2260 = vpop.f32.mrf.mxu0
    %v2261 = vadd.f32 %v2194, %v2260
    %2262 = vdwg.mxu0
    %2263 = vmax.xlane.f32.xlu0 %v2254
    %v2264 = vpop.xlane.xlu0 %2263
    %2265 = vmax.xlane.f32.xlu0 %v2256
    %v2266 = vpop.xlane.xlu0 %2265
    %2267 = vmax.xlane.f32.xlu0 %v2259
    %v2268 = vpop.xlane.xlu0 %2267
    %2269 = vmax.xlane.f32.xlu0 %v2261
    %v2270 = vpop.xlane.xlu0 %2269
    %v2271 = vsub.f32 %v2254, %v2264
    %v2272 = vsub.f32 %v2256, %v2266
    %v2273 = vsub.f32 %v2259, %v2268
    %v2274 = vsub.f32 %v2261, %v2270
    %v2275 = vmul.f32 %v2271, 1.442695
    %v2276 = vpow.pop %v2275
    %v2277 = vmul.f32 %v2272, 1.442695
    %v2278 = vpow.pop %v2277
    %v2279 = vmul.f32 %v2273, 1.442695
    %v2280 = vpow.pop %v2279
    %v2281 = vmul.f32 %v2274, 1.442695
    %v2282 = vpow.pop %v2281
    %2283 = vadd.xlane.f32.xlu0 %v2276
    %v2284 = vpop.xlane.xlu0 %2283
    %2285 = vadd.xlane.f32.xlu0 %v2278
    %v2286 = vpop.xlane.xlu0 %2285
    %2287 = vadd.xlane.f32.xlu0 %v2280
    %v2288 = vpop.xlane.xlu0 %2287
    %2289 = vadd.xlane.f32.xlu0 %v2282
    %v2290 = vpop.xlane.xlu0 %2289
    %v2291 = vlog2.pop %v2284
    %v2292 = vmul.f32 %v2291, 0.6931472
    %v2293 = vlog2.pop %v2286
    %v2294 = vmul.f32 %v2293, 0.6931472
    %v2295 = vlog2.pop %v2288
    %v2296 = vmul.f32 %v2295, 0.6931472
    %v2297 = vlog2.pop %v2290
    %v2298 = vmul.f32 %v2297, 0.6931472
    %v2299 = vsub.f32 %v2271, %v2292
    %v2300 = vsub.f32 %v2272, %v2294
    %v2301 = vsub.f32 %v2273, %v2296
    %v2302 = vsub.f32 %v2274, %v2298
    %2303 = vst [vmem:[%s7] sm:$0xff] %v2299
    %2304 = vst [vmem:[%s7 + $0x8] sm:$0xff] %v2300
    %2305 = vst [vmem:[%s7 + $0x10] sm:$0xff] %v2301
    %2306 = vst [vmem:[%s7 + $0x18] sm:$0xff] %v2302
    // Predicated region
    $region34: #{neural_net_forward.1} parent=1 // pred_check
      _
    $region35: #{neural_net_forward.1} parent=1 // pred_check_branch
      %2308 = sbr.rel (0) target = $region37
    $region36: #{neural_net_forward.1} parent=1 // pred_region
      _
    $region37: #{neural_net_forward.1} parent=1 // pred_fallthru
      _
    // Predicated region
    $region38: #{neural_net_forward.1} parent=1 // pred_check
      _
    $region39: #{neural_net_forward.1} parent=1 // pred_check_branch
      %2310 = sbr.rel (0) target = $region41
    $region40: #{neural_net_forward.1} parent=1 // pred_region
      _
    $region41: #{neural_net_forward.1} parent=1 // pred_fallthru
      _
    %2311 = vsyncpa [#allocation3], 1

</llo_original>
